<compile_context>
chip_gen: v7x
topology: tpu7x:2x2x1
jax: 0.10.0
libtpu: 0.0.40
codegen_flags: <defaults>
</compile_context>

<pallas_src>
import jax
import jax.numpy as jnp
import numpy as np
from jax import lax
from jax.experimental import pallas as pl
from jax.experimental.pallas import tpu as pltpu

# ---------------- configuration (mirrors the module's __init__ args) --------
BATCH = 8
INPUT_DIM = 32                 # input_dim
CONTEXT_DIM = 32               # context_dim
PREPROCESS_OUTPUT_DIM = 32     # preprocess_output_dim (preprocess_module_type="relu")
HIDDEN_SIZES = (64, 64)        # hidden_sizes, layers_modulated = [0, 1]
OUTPUT_SIZE = 16               # output_sizes (single head), output_nonlinearity=None
NUM_SEGMENTS = 4               # num_segments
KW_PERCENT_ON = 0.25           # kw_percent_on
WEIGHT_SPARSITY = 0.5          # weight_sparsity (fraction of zeroed weights)
DENDRITE_WEIGHT_SPARSITY = 0.5 # dendrite_weight_sparsity

KW_K = tuple(max(1, int(round(KW_PERCENT_ON * h))) for h in HIDDEN_SIZES)

H_PAD = 128    # lane-dense padded hidden width (both hidden layers are 64)
OUT_PAD = 128  # lane-dense padded output width (real output = 16)


def _round_up(n, m):
    return ((n + m - 1) // m) * m


# ---------------------------- kernel helpers --------------------------------
def _sigmoid(x):
    # logistic via tanh -> keeps the transcendental on the EUP slot.
    return 0.5 * (jnp.tanh(0.5 * x) + 1.0)


def _abs_max_gate(h, c, seg_flat):
    # seg_flat: [C, S*H_PAD] -> one fused MXU matmul for all segments.
    d = jnp.dot(c, seg_flat, preferred_element_type=jnp.float32)  # [tb, S*H_PAD]
    best = d[:, :H_PAD]
    best_abs = jnp.abs(best)
    for s in range(1, NUM_SEGMENTS):
        ds = d[:, s * H_PAD:(s + 1) * H_PAD]      # static, vreg-aligned lane slice
        a = jnp.abs(ds)
        take = a > best_abs                       # strict ">" == argmax first-tie
        best = jnp.where(take, ds, best)
        best_abs = jnp.maximum(a, best_abs)
    return h * _sigmoid(best)


def _kwinners(h, h_real, k):
    # KWinners with boost_strength=0: keep h >= (k-th largest value per row),
    # which is exactly equivalent to the rank<k rule (ties included).
    # Padded lanes (>= h_real) are masked to -inf so they never win.
    tb, hp = h.shape
    lane = lax.broadcasted_iota(jnp.int32, (tb, hp), 1)
    hm = jnp.where(lane < h_real, h, -jnp.inf)

    t = jnp.full((tb, 1), jnp.inf, dtype=jnp.float32)     # current distinct value bound
    kth = jnp.full((tb, 1), -jnp.inf, dtype=jnp.float32)  # k-th order statistic
    for _ in range(k):
        # next distinct value strictly below t
        m = jnp.max(jnp.where(hm < t, hm, -jnp.inf), axis=-1, keepdims=True)
        # cumulative count of elements >= m
        cnt = jnp.sum(jnp.where(hm >= m, 1.0, 0.0), axis=-1, keepdims=True)
        # first (largest) m with cnt >= k is the k-th order statistic
        kth = jnp.maximum(kth, jnp.where(cnt >= float(k), m, -jnp.inf))
        t = m
    return jnp.where(hm >= kth, h, 0.0)


# ------------------------------- Pallas kernel ------------------------------
def dendritic_mlp_kernel(x_ref, ctx_ref,
                         wp_ref, bp_ref,
                         w1_ref, b1_ref, seg1_ref,
                         w2_ref, b2_ref, seg2_ref,
                         wo_ref, bo_ref,
                         out_ref):
    # --- preprocess module: Linear(context_dim -> preprocess_output_dim) + ReLU
    c = jnp.maximum(
        jnp.dot(ctx_ref[...], wp_ref[...], preferred_element_type=jnp.float32)
        + bp_ref[...], 0.0)

    def layer(a, w, b, seg_flat, h_real, k):
        h = jnp.dot(a, w, preferred_element_type=jnp.float32) + b
        h = _abs_max_gate(h, c, seg_flat)
        return _kwinners(h, h_real, k)

    # --- hidden layers (modulated dendritic layers + k-winners)
    h = layer(x_ref[...], w1_ref[...], b1_ref[...], seg1_ref[...],
              HIDDEN_SIZES[0], KW_K[0])
    h = layer(h, w2_ref[...], b2_ref[...], seg2_ref[...],
              HIDDEN_SIZES[1], KW_K[1])

    # --- output head (output_nonlinearity = None); lane-dense 128-wide store
    out_ref[...] = jnp.dot(h, wo_ref[...],
                           preferred_element_type=jnp.float32) + bo_ref[...]


# --------------------- kernel-operand packing (padding/fusion) ---------------
def _pad_to(a, shape):
    return jnp.pad(a, [(0, t - s) for s, t in zip(a.shape, shape)])


def pack_kernel_params(p):
    def pack_seg(seg):                        # [S, C, H] -> [C, S*H_PAD]
        s, c, h = seg.shape
        seg = jnp.transpose(seg, (1, 0, 2))   # [C, S, H]
        seg = jnp.pad(seg, ((0, 0), (0, 0), (0, H_PAD - h)))
        return seg.reshape(c, s * H_PAD)

    return dict(
        wp=p["wp"], bp=p["bp"],
        w1=_pad_to(p["w1"], (INPUT_DIM, H_PAD)),
        b1=_pad_to(p["b1"], (1, H_PAD)),
        seg1=pack_seg(p["seg1"]),
        w2=_pad_to(p["w2"], (H_PAD, H_PAD)),
        b2=_pad_to(p["b2"], (1, H_PAD)),
        seg2=pack_seg(p["seg2"]),
        wo=_pad_to(p["wo"], (H_PAD, OUT_PAD)),
        bo=_pad_to(p["bo"], (1, OUT_PAD)),
    )


# ------------------------------- wrapper -------------------------------------
def custom_dendritic_mlp(x, context, params, tile_b=None):
    B = x.shape[0]
    b8 = _round_up(B, 8)
    if tile_b is None:
        tile_b = min(128, b8)        # biggest tile that still fits trivially
    tile_b = _round_up(tile_b, 8)
    b_pad = _round_up(b8, tile_b)

    if b_pad != B:
        x = jnp.pad(x, ((0, b_pad - B), (0, 0)))
        context = jnp.pad(context, ((0, b_pad - B), (0, 0)))

    kp = pack_kernel_params(params)
    weights = (kp["wp"], kp["bp"],
               kp["w1"], kp["b1"], kp["seg1"],
               kp["w2"], kp["b2"], kp["seg2"],
               kp["wo"], kp["bo"])
    w_specs = [pl.BlockSpec(w.shape, lambda i: (0, 0)) for w in weights]

    out = pl.pallas_call(
        dendritic_mlp_kernel,
        out_shape=jax.ShapeDtypeStruct((b_pad, OUT_PAD), jnp.float32),
        grid=(b_pad // tile_b,),
        in_specs=[pl.BlockSpec((tile_b, INPUT_DIM), lambda i: (i, 0)),
                  pl.BlockSpec((tile_b, CONTEXT_DIM), lambda i: (i, 0))] + w_specs,
        out_specs=pl.BlockSpec((tile_b, OUT_PAD), lambda i: (i, 0)),
        compiler_params=pltpu.CompilerParams(
            dimension_semantics=("parallel",)),
    )(x, context, *weights)
    return out[:B, :OUTPUT_SIZE]


# --------------------------- parameter construction -------------------------
def _sparse_linear(key, fan_in, fan_out, sparsity):
    kw, km = jax.random.split(key)
    w = jax.random.normal(kw, (fan_in, fan_out), jnp.float32) * np.sqrt(2.0 / fan_in)
    if sparsity > 0.0:
        mask = (jax.random.uniform(km, (fan_in, fan_out)) >= sparsity)
        w = w * mask.astype(jnp.float32)
    return w


def make_params(key):
    ks = jax.random.split(key, 12)
    params = {}
    # preprocess module (dense Linear, bias=True)
    params["wp"] = jax.random.normal(ks[0], (CONTEXT_DIM, PREPROCESS_OUTPUT_DIM),
                                     jnp.float32) * np.sqrt(1.0 / CONTEXT_DIM)
    params["bp"] = jax.random.normal(ks[1], (1, PREPROCESS_OUTPUT_DIM), jnp.float32) * 0.01
    # hidden layer 1 (SparseWeights linear + dendrite segments)
    params["w1"] = _sparse_linear(ks[2], INPUT_DIM, HIDDEN_SIZES[0], WEIGHT_SPARSITY)
    params["b1"] = jax.random.normal(ks[3], (1, HIDDEN_SIZES[0]), jnp.float32) * 0.01
    params["seg1"] = _sparse_linear(ks[4], PREPROCESS_OUTPUT_DIM,
                                    NUM_SEGMENTS * HIDDEN_SIZES[0],
                                    DENDRITE_WEIGHT_SPARSITY
                                    ).reshape(PREPROCESS_OUTPUT_DIM, NUM_SEGMENTS,
                                              HIDDEN_SIZES[0]).transpose(1, 0, 2) * 0.1
    # hidden layer 2
    params["w2"] = _sparse_linear(ks[5], HIDDEN_SIZES[0], HIDDEN_SIZES[1], WEIGHT_SPARSITY)
    params["b2"] = jax.random.normal(ks[6], (1, HIDDEN_SIZES[1]), jnp.float32) * 0.01
    params["seg2"] = _sparse_linear(ks[7], PREPROCESS_OUTPUT_DIM,
                                    NUM_SEGMENTS * HIDDEN_SIZES[1],
                                    DENDRITE_WEIGHT_SPARSITY
                                    ).reshape(PREPROCESS_OUTPUT_DIM, NUM_SEGMENTS,
                                              HIDDEN_SIZES[1]).transpose(1, 0, 2) * 0.1
    # output head
    params["wo"] = jax.random.normal(ks[8], (HIDDEN_SIZES[1], OUTPUT_SIZE),
                                     jnp.float32) * np.sqrt(1.0 / HIDDEN_SIZES[1])
    params["bo"] = jax.random.normal(ks[9], (1, OUTPUT_SIZE), jnp.float32) * 0.01
    return params


# --------------------------- pure-JAX reference ------------------------------
def reference_forward(x, context, p):
    c = jnp.maximum(context @ p["wp"] + p["bp"], 0.0)

    def layer(h_in, w, b, seg, k):
        h = h_in @ w + b
        d = jnp.einsum("bc,sch->bsh", c, seg)                    # [B, S, H]
        idx = jnp.argmax(jnp.abs(d), axis=1)                     # [B, H]
        sel = jnp.take_along_axis(d, idx[:, None, :], axis=1)[:, 0, :]
        h = h * jax.nn.sigmoid(sel)
        rank = jnp.sum((h[:, None, :] > h[:, :, None]).astype(jnp.int32), axis=-1)
        return jnp.where(rank < k, h, 0.0)

    h = layer(x, p["w1"], p["b1"], p["seg1"], KW_K[0])
    h = layer(h, p["w2"], p["b2"], p["seg2"], KW_K[1])
    return h @ p["wo"] + p["bo"]


# ------------------------------------ main -----------------------------------
if __name__ == "__main__":
    key = jax.random.PRNGKey(0)
    kx, kc, kparam = jax.random.split(key, 3)
    params = make_params(kparam)

    # Case 1: small batch, single grid step (auto tile size).
    x = jax.random.normal(kx, (BATCH, INPUT_DIM), jnp.float32)
    context = jax.random.normal(kc, (BATCH, CONTEXT_DIM), jnp.float32)
    out = jax.block_until_ready(custom_dendritic_mlp(x, context, params))
    ref = reference_forward(x, context, params)
    np.testing.assert_allclose(np.asarray(out), np.asarray(ref), rtol=1e-4, atol=1e-4)

    # Case 2: multi-step batch grid (exercises the 'parallel' axis / index maps).
    kx2, kc2 = jax.random.split(jax.random.PRNGKey(1))
    x2 = jax.random.normal(kx2, (32, INPUT_DIM), jnp.float32)
    c2 = jax.random.normal(kc2, (32, CONTEXT_DIM), jnp.float32)
    out2 = jax.block_until_ready(custom_dendritic_mlp(x2, c2, params, tile_b=8))
    ref2 = reference_forward(x2, c2, params)
    np.testing.assert_allclose(np.asarray(out2), np.asarray(ref2), rtol=1e-4, atol=1e-4)

    print("KERNEL_OK")
</pallas_src>

<mosaic_0001>
module attributes {stable_mosaic.version = 11 : i64} {
  func.func @dendritic_mlp_kernel(%arg0: i32, %arg1: memref<8x32xf32, #tpu.memory_space<vmem>>, %arg2: memref<8x32xf32, #tpu.memory_space<vmem>>, %arg3: memref<32x32xf32, #tpu.memory_space<vmem>>, %arg4: memref<1x32xf32, #tpu.memory_space<vmem>>, %arg5: memref<32x128xf32, #tpu.memory_space<vmem>>, %arg6: memref<1x128xf32, #tpu.memory_space<vmem>>, %arg7: memref<32x512xf32, #tpu.memory_space<vmem>>, %arg8: memref<128x128xf32, #tpu.memory_space<vmem>>, %arg9: memref<1x128xf32, #tpu.memory_space<vmem>>, %arg10: memref<32x512xf32, #tpu.memory_space<vmem>>, %arg11: memref<128x128xf32, #tpu.memory_space<vmem>>, %arg12: memref<1x128xf32, #tpu.memory_space<vmem>>, %arg13: memref<8x128xf32, #tpu.memory_space<vmem>>) attributes {dimension_semantics = [#tpu.dimension_semantics<parallel>], iteration_bounds = array<i64: 1>, scalar_prefetch = 0 : i64, scratch_operands = 0 : i64, tpu.core_type = #tpu.core_type<tc>, window_params = [{transform_indices = @transform_0, window_bounds = array<i64: 8, 32>}, {transform_indices = @transform_1, window_bounds = array<i64: 8, 32>}, {pipeline_mode = #tpu.pipeline_mode<synchronous>, transform_indices = @transform_2, window_bounds = array<i64: 32, 32>}, {pipeline_mode = #tpu.pipeline_mode<synchronous>, transform_indices = @transform_3, window_bounds = array<i64: 1, 32>}, {pipeline_mode = #tpu.pipeline_mode<synchronous>, transform_indices = @transform_4, window_bounds = array<i64: 32, 128>}, {pipeline_mode = #tpu.pipeline_mode<synchronous>, transform_indices = @transform_5, window_bounds = array<i64: 1, 128>}, {pipeline_mode = #tpu.pipeline_mode<synchronous>, transform_indices = @transform_6, window_bounds = array<i64: 32, 512>}, {pipeline_mode = #tpu.pipeline_mode<synchronous>, transform_indices = @transform_7, window_bounds = array<i64: 128, 128>}, {pipeline_mode = #tpu.pipeline_mode<synchronous>, transform_indices = @transform_8, window_bounds = array<i64: 1, 128>}, {pipeline_mode = #tpu.pipeline_mode<synchronous>, transform_indices = @transform_9, window_bounds = array<i64: 32, 512>}, {pipeline_mode = #tpu.pipeline_mode<synchronous>, transform_indices = @transform_10, window_bounds = array<i64: 128, 128>}, {pipeline_mode = #tpu.pipeline_mode<synchronous>, transform_indices = @transform_11, window_bounds = array<i64: 1, 128>}, {transform_indices = @transform_12, window_bounds = array<i64: 8, 128>}]} {
    %c0 = arith.constant 0 : index
    %c0_0 = arith.constant 0 : index
    %0 = vector.load %arg2[%c0, %c0_0] : memref<8x32xf32, #tpu.memory_space<vmem>>, vector<8x32xf32>
    %c0_1 = arith.constant 0 : index
    %c0_2 = arith.constant 0 : index
    %1 = vector.load %arg3[%c0_1, %c0_2] : memref<32x32xf32, #tpu.memory_space<vmem>>, vector<32x32xf32>
    %cst = arith.constant dense<0.000000e+00> : vector<8x32xf32>
    %2 = tpu.matmul %0, %1, %cst {dimension_numbers = #tpu.dot_dimension_numbers<[1], [0], [0], [1], [0, 0, 1, 1], [], []>} : vector<8x32xf32>, vector<32x32xf32>, vector<8x32xf32> -> vector<8x32xf32>
    %c0_3 = arith.constant 0 : index
    %c0_4 = arith.constant 0 : index
    %3 = vector.load %arg4[%c0_3, %c0_4] : memref<1x32xf32, #tpu.memory_space<vmem>>, vector<1x32xf32>
    %4 = vector.broadcast %3 : vector<1x32xf32> to vector<8x32xf32>
    %5 = arith.addf %2, %4 : vector<8x32xf32>
    %cst_5 = arith.constant 0.000000e+00 : f32
    %6 = vector.broadcast %cst_5 : f32 to vector<8x32xf32>
    %7 = arith.maximumf %5, %6 : vector<8x32xf32>
    %c0_6 = arith.constant 0 : index
    %c0_7 = arith.constant 0 : index
    %8 = vector.load %arg1[%c0_6, %c0_7] : memref<8x32xf32, #tpu.memory_space<vmem>>, vector<8x32xf32>
    %c0_8 = arith.constant 0 : index
    %c0_9 = arith.constant 0 : index
    %9 = vector.load %arg5[%c0_8, %c0_9] : memref<32x128xf32, #tpu.memory_space<vmem>>, vector<32x128xf32>
    %c0_10 = arith.constant 0 : index
    %c0_11 = arith.constant 0 : index
    %10 = vector.load %arg6[%c0_10, %c0_11] : memref<1x128xf32, #tpu.memory_space<vmem>>, vector<1x128xf32>
    %c0_12 = arith.constant 0 : index
    %c0_13 = arith.constant 0 : index
    %11 = vector.load %arg7[%c0_12, %c0_13] : memref<32x512xf32, #tpu.memory_space<vmem>>, vector<32x512xf32>
    %cst_14 = arith.constant dense<0.000000e+00> : vector<8x128xf32>
    %12 = tpu.matmul %8, %9, %cst_14 {dimension_numbers = #tpu.dot_dimension_numbers<[1], [0], [0], [1], [0, 0, 1, 1], [], []>} : vector<8x32xf32>, vector<32x128xf32>, vector<8x128xf32> -> vector<8x128xf32>
    %13 = vector.broadcast %10 : vector<1x128xf32> to vector<8x128xf32>
    %14 = arith.addf %12, %13 : vector<8x128xf32>
    %cst_15 = arith.constant dense<0.000000e+00> : vector<8x512xf32>
    %15 = tpu.matmul %7, %11, %cst_15 {dimension_numbers = #tpu.dot_dimension_numbers<[1], [0], [0], [1], [0, 0, 1, 1], [], []>} : vector<8x32xf32>, vector<32x512xf32>, vector<8x512xf32> -> vector<8x512xf32>
    %16 = vector.extract_strided_slice %15 {offsets = [0, 0], sizes = [8, 128], strides = [1, 1]} : vector<8x512xf32> to vector<8x128xf32>
    %17 = math.absf %16 : vector<8x128xf32>
    %18 = vector.extract_strided_slice %15 {offsets = [0, 128], sizes = [8, 128], strides = [1, 1]} : vector<8x512xf32> to vector<8x128xf32>
    %19 = math.absf %18 : vector<8x128xf32>
    %20 = arith.cmpf ogt, %19, %17 : vector<8x128xf32>
    %21 = arith.select %20, %18, %16 : vector<8x128xi1>, vector<8x128xf32>
    %22 = arith.maximumf %19, %17 : vector<8x128xf32>
    %23 = vector.extract_strided_slice %15 {offsets = [0, 256], sizes = [8, 128], strides = [1, 1]} : vector<8x512xf32> to vector<8x128xf32>
    %24 = math.absf %23 : vector<8x128xf32>
    %25 = arith.cmpf ogt, %24, %22 : vector<8x128xf32>
    %26 = arith.select %25, %23, %21 : vector<8x128xi1>, vector<8x128xf32>
    %27 = arith.maximumf %24, %22 : vector<8x128xf32>
    %28 = vector.extract_strided_slice %15 {offsets = [0, 384], sizes = [8, 128], strides = [1, 1]} : vector<8x512xf32> to vector<8x128xf32>
    %29 = math.absf %28 : vector<8x128xf32>
    %30 = arith.cmpf ogt, %29, %27 : vector<8x128xf32>
    %31 = arith.select %30, %28, %26 : vector<8x128xi1>, vector<8x128xf32>
    %cst_16 = arith.constant 5.000000e-01 : f32
    %32 = vector.broadcast %cst_16 : f32 to vector<8x128xf32>
    %33 = arith.mulf %32, %31 : vector<8x128xf32>
    %34 = math.tanh %33 : vector<8x128xf32>
    %cst_17 = arith.constant 1.000000e+00 : f32
    %35 = vector.broadcast %cst_17 : f32 to vector<8x128xf32>
    %36 = arith.addf %34, %35 : vector<8x128xf32>
    %cst_18 = arith.constant 5.000000e-01 : f32
    %37 = vector.broadcast %cst_18 : f32 to vector<8x128xf32>
    %38 = arith.mulf %37, %36 : vector<8x128xf32>
    %39 = arith.mulf %14, %38 : vector<8x128xf32>
    %40 = tpu.iota {dimensions = array<i32: 1>} : vector<8x128xi32>
    %c64_i32 = arith.constant 64 : i32
    %41 = vector.broadcast %c64_i32 : i32 to vector<8x128xi32>
    %42 = arith.cmpi slt, %40, %41 : vector<8x128xi32>
    %cst_19 = arith.constant 0xFF800000 : f32
    %43 = vector.broadcast %cst_19 : f32 to vector<8x128xf32>
    %44 = arith.select %42, %39, %43 : vector<8x128xi1>, vector<8x128xf32>
    %cst_20 = arith.constant 0x7F800000 : f32
    %45 = vector.broadcast %cst_20 : f32 to vector<8x1xf32>
    %cst_21 = arith.constant 0xFF800000 : f32
    %46 = vector.broadcast %cst_21 : f32 to vector<8x1xf32>
    %47 = vector.broadcast %45 : vector<8x1xf32> to vector<8x128xf32>
    %48 = arith.cmpf olt, %44, %47 : vector<8x128xf32>
    %cst_22 = arith.constant 0xFF800000 : f32
    %49 = vector.broadcast %cst_22 : f32 to vector<8x128xf32>
    %50 = arith.select %48, %44, %49 : vector<8x128xi1>, vector<8x128xf32>
    %cst_23 = arith.constant dense<0xFF800000> : vector<8xf32>
    %51 = vector.multi_reduction <maximumf>, %50, %cst_23 [1] : vector<8x128xf32> to vector<8xf32>
    %52 = vector.shape_cast %51 : vector<8xf32> to vector<8x1xf32>
    %53 = vector.broadcast %52 : vector<8x1xf32> to vector<8x128xf32>
    %54 = arith.cmpf oge, %44, %53 : vector<8x128xf32>
    %cst_24 = arith.constant 1.000000e+00 : f32
    %cst_25 = arith.constant 0.000000e+00 : f32
    %55 = vector.broadcast %cst_24 : f32 to vector<8x128xf32>
    %56 = vector.broadcast %cst_25 : f32 to vector<8x128xf32>
    %57 = arith.select %54, %55, %56 : vector<8x128xi1>, vector<8x128xf32>
    %cst_26 = arith.constant dense<0.000000e+00> : vector<8xf32>
    %58 = vector.multi_reduction <add>, %57, %cst_26 [1] : vector<8x128xf32> to vector<8xf32>
    %59 = vector.shape_cast %58 : vector<8xf32> to vector<8x1xf32>
    %cst_27 = arith.constant 1.600000e+01 : f32
    %60 = vector.broadcast %cst_27 : f32 to vector<8x1xf32>
    %61 = arith.cmpf oge, %59, %60 : vector<8x1xf32>
    %cst_28 = arith.constant 0xFF800000 : f32
    %62 = vector.broadcast %cst_28 : f32 to vector<8x1xf32>
    %63 = arith.select %61, %52, %62 : vector<8x1xi1>, vector<8x1xf32>
    %64 = arith.maximumf %46, %63 : vector<8x1xf32>
    %65 = vector.broadcast %52 : vector<8x1xf32> to vector<8x128xf32>
    %66 = arith.cmpf olt, %44, %65 : vector<8x128xf32>
    %cst_29 = arith.constant 0xFF800000 : f32
    %67 = vector.broadcast %cst_29 : f32 to vector<8x128xf32>
    %68 = arith.select %66, %44, %67 : vector<8x128xi1>, vector<8x128xf32>
    %cst_30 = arith.constant dense<0xFF800000> : vector<8xf32>
    %69 = vector.multi_reduction <maximumf>, %68, %cst_30 [1] : vector<8x128xf32> to vector<8xf32>
    %70 = vector.shape_cast %69 : vector<8xf32> to vector<8x1xf32>
    %71 = vector.broadcast %70 : vector<8x1xf32> to vector<8x128xf32>
    %72 = arith.cmpf oge, %44, %71 : vector<8x128xf32>
    %cst_31 = arith.constant 1.000000e+00 : f32
    %cst_32 = arith.constant 0.000000e+00 : f32
    %73 = vector.broadcast %cst_31 : f32 to vector<8x128xf32>
    %74 = vector.broadcast %cst_32 : f32 to vector<8x128xf32>
    %75 = arith.select %72, %73, %74 : vector<8x128xi1>, vector<8x128xf32>
    %cst_33 = arith.constant dense<0.000000e+00> : vector<8xf32>
    %76 = vector.multi_reduction <add>, %75, %cst_33 [1] : vector<8x128xf32> to vector<8xf32>
    %77 = vector.shape_cast %76 : vector<8xf32> to vector<8x1xf32>
    %cst_34 = arith.constant 1.600000e+01 : f32
    %78 = vector.broadcast %cst_34 : f32 to vector<8x1xf32>
    %79 = arith.cmpf oge, %77, %78 : vector<8x1xf32>
    %cst_35 = arith.constant 0xFF800000 : f32
    %80 = vector.broadcast %cst_35 : f32 to vector<8x1xf32>
    %81 = arith.select %79, %70, %80 : vector<8x1xi1>, vector<8x1xf32>
    %82 = arith.maximumf %64, %81 : vector<8x1xf32>
    %83 = vector.broadcast %70 : vector<8x1xf32> to vector<8x128xf32>
    %84 = arith.cmpf olt, %44, %83 : vector<8x128xf32>
    %cst_36 = arith.constant 0xFF800000 : f32
    %85 = vector.broadcast %cst_36 : f32 to vector<8x128xf32>
    %86 = arith.select %84, %44, %85 : vector<8x128xi1>, vector<8x128xf32>
    %cst_37 = arith.constant dense<0xFF800000> : vector<8xf32>
    %87 = vector.multi_reduction <maximumf>, %86, %cst_37 [1] : vector<8x128xf32> to vector<8xf32>
    %88 = vector.shape_cast %87 : vector<8xf32> to vector<8x1xf32>
    %89 = vector.broadcast %88 : vector<8x1xf32> to vector<8x128xf32>
    %90 = arith.cmpf oge, %44, %89 : vector<8x128xf32>
    %cst_38 = arith.constant 1.000000e+00 : f32
    %cst_39 = arith.constant 0.000000e+00 : f32
    %91 = vector.broadcast %cst_38 : f32 to vector<8x128xf32>
    %92 = vector.broadcast %cst_39 : f32 to vector<8x128xf32>
    %93 = arith.select %90, %91, %92 : vector<8x128xi1>, vector<8x128xf32>
    %cst_40 = arith.constant dense<0.000000e+00> : vector<8xf32>
    %94 = vector.multi_reduction <add>, %93, %cst_40 [1] : vector<8x128xf32> to vector<8xf32>
    %95 = vector.shape_cast %94 : vector<8xf32> to vector<8x1xf32>
    %cst_41 = arith.constant 1.600000e+01 : f32
    %96 = vector.broadcast %cst_41 : f32 to vector<8x1xf32>
    %97 = arith.cmpf oge, %95, %96 : vector<8x1xf32>
    %cst_42 = arith.constant 0xFF800000 : f32
    %98 = vector.broadcast %cst_42 : f32 to vector<8x1xf32>
    %99 = arith.select %97, %88, %98 : vector<8x1xi1>, vector<8x1xf32>
    %100 = arith.maximumf %82, %99 : vector<8x1xf32>
    %101 = vector.broadcast %88 : vector<8x1xf32> to vector<8x128xf32>
    %102 = arith.cmpf olt, %44, %101 : vector<8x128xf32>
    %cst_43 = arith.constant 0xFF800000 : f32
    %103 = vector.broadcast %cst_43 : f32 to vector<8x128xf32>
    %104 = arith.select %102, %44, %103 : vector<8x128xi1>, vector<8x128xf32>
    %cst_44 = arith.constant dense<0xFF800000> : vector<8xf32>
    %105 = vector.multi_reduction <maximumf>, %104, %cst_44 [1] : vector<8x128xf32> to vector<8xf32>
    %106 = vector.shape_cast %105 : vector<8xf32> to vector<8x1xf32>
    %107 = vector.broadcast %106 : vector<8x1xf32> to vector<8x128xf32>
    %108 = arith.cmpf oge, %44, %107 : vector<8x128xf32>
    %cst_45 = arith.constant 1.000000e+00 : f32
    %cst_46 = arith.constant 0.000000e+00 : f32
    %109 = vector.broadcast %cst_45 : f32 to vector<8x128xf32>
    %110 = vector.broadcast %cst_46 : f32 to vector<8x128xf32>
    %111 = arith.select %108, %109, %110 : vector<8x128xi1>, vector<8x128xf32>
    %cst_47 = arith.constant dense<0.000000e+00> : vector<8xf32>
    %112 = vector.multi_reduction <add>, %111, %cst_47 [1] : vector<8x128xf32> to vector<8xf32>
    %113 = vector.shape_cast %112 : vector<8xf32> to vector<8x1xf32>
    %cst_48 = arith.constant 1.600000e+01 : f32
    %114 = vector.broadcast %cst_48 : f32 to vector<8x1xf32>
    %115 = arith.cmpf oge, %113, %114 : vector<8x1xf32>
    %cst_49 = arith.constant 0xFF800000 : f32
    %116 = vector.broadcast %cst_49 : f32 to vector<8x1xf32>
    %117 = arith.select %115, %106, %116 : vector<8x1xi1>, vector<8x1xf32>
    %118 = arith.maximumf %100, %117 : vector<8x1xf32>
    %119 = vector.broadcast %106 : vector<8x1xf32> to vector<8x128xf32>
    %120 = arith.cmpf olt, %44, %119 : vector<8x128xf32>
    %cst_50 = arith.constant 0xFF800000 : f32
    %121 = vector.broadcast %cst_50 : f32 to vector<8x128xf32>
    %122 = arith.select %120, %44, %121 : vector<8x128xi1>, vector<8x128xf32>
    %cst_51 = arith.constant dense<0xFF800000> : vector<8xf32>
    %123 = vector.multi_reduction <maximumf>, %122, %cst_51 [1] : vector<8x128xf32> to vector<8xf32>
    %124 = vector.shape_cast %123 : vector<8xf32> to vector<8x1xf32>
    %125 = vector.broadcast %124 : vector<8x1xf32> to vector<8x128xf32>
    %126 = arith.cmpf oge, %44, %125 : vector<8x128xf32>
    %cst_52 = arith.constant 1.000000e+00 : f32
    %cst_53 = arith.constant 0.000000e+00 : f32
    %127 = vector.broadcast %cst_52 : f32 to vector<8x128xf32>
    %128 = vector.broadcast %cst_53 : f32 to vector<8x128xf32>
    %129 = arith.select %126, %127, %128 : vector<8x128xi1>, vector<8x128xf32>
    %cst_54 = arith.constant dense<0.000000e+00> : vector<8xf32>
    %130 = vector.multi_reduction <add>, %129, %cst_54 [1] : vector<8x128xf32> to vector<8xf32>
    %131 = vector.shape_cast %130 : vector<8xf32> to vector<8x1xf32>
    %cst_55 = arith.constant 1.600000e+01 : f32
    %132 = vector.broadcast %cst_55 : f32 to vector<8x1xf32>
    %133 = arith.cmpf oge, %131, %132 : vector<8x1xf32>
    %cst_56 = arith.constant 0xFF800000 : f32
    %134 = vector.broadcast %cst_56 : f32 to vector<8x1xf32>
    %135 = arith.select %133, %124, %134 : vector<8x1xi1>, vector<8x1xf32>
    %136 = arith.maximumf %118, %135 : vector<8x1xf32>
    %137 = vector.broadcast %124 : vector<8x1xf32> to vector<8x128xf32>
    %138 = arith.cmpf olt, %44, %137 : vector<8x128xf32>
    %cst_57 = arith.constant 0xFF800000 : f32
    %139 = vector.broadcast %cst_57 : f32 to vector<8x128xf32>
    %140 = arith.select %138, %44, %139 : vector<8x128xi1>, vector<8x128xf32>
    %cst_58 = arith.constant dense<0xFF800000> : vector<8xf32>
    %141 = vector.multi_reduction <maximumf>, %140, %cst_58 [1] : vector<8x128xf32> to vector<8xf32>
    %142 = vector.shape_cast %141 : vector<8xf32> to vector<8x1xf32>
    %143 = vector.broadcast %142 : vector<8x1xf32> to vector<8x128xf32>
    %144 = arith.cmpf oge, %44, %143 : vector<8x128xf32>
    %cst_59 = arith.constant 1.000000e+00 : f32
    %cst_60 = arith.constant 0.000000e+00 : f32
    %145 = vector.broadcast %cst_59 : f32 to vector<8x128xf32>
    %146 = vector.broadcast %cst_60 : f32 to vector<8x128xf32>
    %147 = arith.select %144, %145, %146 : vector<8x128xi1>, vector<8x128xf32>
    %cst_61 = arith.constant dense<0.000000e+00> : vector<8xf32>
    %148 = vector.multi_reduction <add>, %147, %cst_61 [1] : vector<8x128xf32> to vector<8xf32>
    %149 = vector.shape_cast %148 : vector<8xf32> to vector<8x1xf32>
    %cst_62 = arith.constant 1.600000e+01 : f32
    %150 = vector.broadcast %cst_62 : f32 to vector<8x1xf32>
    %151 = arith.cmpf oge, %149, %150 : vector<8x1xf32>
    %cst_63 = arith.constant 0xFF800000 : f32
    %152 = vector.broadcast %cst_63 : f32 to vector<8x1xf32>
    %153 = arith.select %151, %142, %152 : vector<8x1xi1>, vector<8x1xf32>
    %154 = arith.maximumf %136, %153 : vector<8x1xf32>
    %155 = vector.broadcast %142 : vector<8x1xf32> to vector<8x128xf32>
    %156 = arith.cmpf olt, %44, %155 : vector<8x128xf32>
    %cst_64 = arith.constant 0xFF800000 : f32
    %157 = vector.broadcast %cst_64 : f32 to vector<8x128xf32>
    %158 = arith.select %156, %44, %157 : vector<8x128xi1>, vector<8x128xf32>
    %cst_65 = arith.constant dense<0xFF800000> : vector<8xf32>
    %159 = vector.multi_reduction <maximumf>, %158, %cst_65 [1] : vector<8x128xf32> to vector<8xf32>
    %160 = vector.shape_cast %159 : vector<8xf32> to vector<8x1xf32>
    %161 = vector.broadcast %160 : vector<8x1xf32> to vector<8x128xf32>
    %162 = arith.cmpf oge, %44, %161 : vector<8x128xf32>
    %cst_66 = arith.constant 1.000000e+00 : f32
    %cst_67 = arith.constant 0.000000e+00 : f32
    %163 = vector.broadcast %cst_66 : f32 to vector<8x128xf32>
    %164 = vector.broadcast %cst_67 : f32 to vector<8x128xf32>
    %165 = arith.select %162, %163, %164 : vector<8x128xi1>, vector<8x128xf32>
    %cst_68 = arith.constant dense<0.000000e+00> : vector<8xf32>
    %166 = vector.multi_reduction <add>, %165, %cst_68 [1] : vector<8x128xf32> to vector<8xf32>
    %167 = vector.shape_cast %166 : vector<8xf32> to vector<8x1xf32>
    %cst_69 = arith.constant 1.600000e+01 : f32
    %168 = vector.broadcast %cst_69 : f32 to vector<8x1xf32>
    %169 = arith.cmpf oge, %167, %168 : vector<8x1xf32>
    %cst_70 = arith.constant 0xFF800000 : f32
    %170 = vector.broadcast %cst_70 : f32 to vector<8x1xf32>
    %171 = arith.select %169, %160, %170 : vector<8x1xi1>, vector<8x1xf32>
    %172 = arith.maximumf %154, %171 : vector<8x1xf32>
    %173 = vector.broadcast %160 : vector<8x1xf32> to vector<8x128xf32>
    %174 = arith.cmpf olt, %44, %173 : vector<8x128xf32>
    %cst_71 = arith.constant 0xFF800000 : f32
    %175 = vector.broadcast %cst_71 : f32 to vector<8x128xf32>
    %176 = arith.select %174, %44, %175 : vector<8x128xi1>, vector<8x128xf32>
    %cst_72 = arith.constant dense<0xFF800000> : vector<8xf32>
    %177 = vector.multi_reduction <maximumf>, %176, %cst_72 [1] : vector<8x128xf32> to vector<8xf32>
    %178 = vector.shape_cast %177 : vector<8xf32> to vector<8x1xf32>
    %179 = vector.broadcast %178 : vector<8x1xf32> to vector<8x128xf32>
    %180 = arith.cmpf oge, %44, %179 : vector<8x128xf32>
    %cst_73 = arith.constant 1.000000e+00 : f32
    %cst_74 = arith.constant 0.000000e+00 : f32
    %181 = vector.broadcast %cst_73 : f32 to vector<8x128xf32>
    %182 = vector.broadcast %cst_74 : f32 to vector<8x128xf32>
    %183 = arith.select %180, %181, %182 : vector<8x128xi1>, vector<8x128xf32>
    %cst_75 = arith.constant dense<0.000000e+00> : vector<8xf32>
    %184 = vector.multi_reduction <add>, %183, %cst_75 [1] : vector<8x128xf32> to vector<8xf32>
    %185 = vector.shape_cast %184 : vector<8xf32> to vector<8x1xf32>
    %cst_76 = arith.constant 1.600000e+01 : f32
    %186 = vector.broadcast %cst_76 : f32 to vector<8x1xf32>
    %187 = arith.cmpf oge, %185, %186 : vector<8x1xf32>
    %cst_77 = arith.constant 0xFF800000 : f32
    %188 = vector.broadcast %cst_77 : f32 to vector<8x1xf32>
    %189 = arith.select %187, %178, %188 : vector<8x1xi1>, vector<8x1xf32>
    %190 = arith.maximumf %172, %189 : vector<8x1xf32>
    %191 = vector.broadcast %178 : vector<8x1xf32> to vector<8x128xf32>
    %192 = arith.cmpf olt, %44, %191 : vector<8x128xf32>
    %cst_78 = arith.constant 0xFF800000 : f32
    %193 = vector.broadcast %cst_78 : f32 to vector<8x128xf32>
    %194 = arith.select %192, %44, %193 : vector<8x128xi1>, vector<8x128xf32>
    %cst_79 = arith.constant dense<0xFF800000> : vector<8xf32>
    %195 = vector.multi_reduction <maximumf>, %194, %cst_79 [1] : vector<8x128xf32> to vector<8xf32>
    %196 = vector.shape_cast %195 : vector<8xf32> to vector<8x1xf32>
    %197 = vector.broadcast %196 : vector<8x1xf32> to vector<8x128xf32>
    %198 = arith.cmpf oge, %44, %197 : vector<8x128xf32>
    %cst_80 = arith.constant 1.000000e+00 : f32
    %cst_81 = arith.constant 0.000000e+00 : f32
    %199 = vector.broadcast %cst_80 : f32 to vector<8x128xf32>
    %200 = vector.broadcast %cst_81 : f32 to vector<8x128xf32>
    %201 = arith.select %198, %199, %200 : vector<8x128xi1>, vector<8x128xf32>
    %cst_82 = arith.constant dense<0.000000e+00> : vector<8xf32>
    %202 = vector.multi_reduction <add>, %201, %cst_82 [1] : vector<8x128xf32> to vector<8xf32>
    %203 = vector.shape_cast %202 : vector<8xf32> to vector<8x1xf32>
    %cst_83 = arith.constant 1.600000e+01 : f32
    %204 = vector.broadcast %cst_83 : f32 to vector<8x1xf32>
    %205 = arith.cmpf oge, %203, %204 : vector<8x1xf32>
    %cst_84 = arith.constant 0xFF800000 : f32
    %206 = vector.broadcast %cst_84 : f32 to vector<8x1xf32>
    %207 = arith.select %205, %196, %206 : vector<8x1xi1>, vector<8x1xf32>
    %208 = arith.maximumf %190, %207 : vector<8x1xf32>
    %209 = vector.broadcast %196 : vector<8x1xf32> to vector<8x128xf32>
    %210 = arith.cmpf olt, %44, %209 : vector<8x128xf32>
    %cst_85 = arith.constant 0xFF800000 : f32
    %211 = vector.broadcast %cst_85 : f32 to vector<8x128xf32>
    %212 = arith.select %210, %44, %211 : vector<8x128xi1>, vector<8x128xf32>
    %cst_86 = arith.constant dense<0xFF800000> : vector<8xf32>
    %213 = vector.multi_reduction <maximumf>, %212, %cst_86 [1] : vector<8x128xf32> to vector<8xf32>
    %214 = vector.shape_cast %213 : vector<8xf32> to vector<8x1xf32>
    %215 = vector.broadcast %214 : vector<8x1xf32> to vector<8x128xf32>
    %216 = arith.cmpf oge, %44, %215 : vector<8x128xf32>
    %cst_87 = arith.constant 1.000000e+00 : f32
    %cst_88 = arith.constant 0.000000e+00 : f32
    %217 = vector.broadcast %cst_87 : f32 to vector<8x128xf32>
    %218 = vector.broadcast %cst_88 : f32 to vector<8x128xf32>
    %219 = arith.select %216, %217, %218 : vector<8x128xi1>, vector<8x128xf32>
    %cst_89 = arith.constant dense<0.000000e+00> : vector<8xf32>
    %220 = vector.multi_reduction <add>, %219, %cst_89 [1] : vector<8x128xf32> to vector<8xf32>
    %221 = vector.shape_cast %220 : vector<8xf32> to vector<8x1xf32>
    %cst_90 = arith.constant 1.600000e+01 : f32
    %222 = vector.broadcast %cst_90 : f32 to vector<8x1xf32>
    %223 = arith.cmpf oge, %221, %222 : vector<8x1xf32>
    %cst_91 = arith.constant 0xFF800000 : f32
    %224 = vector.broadcast %cst_91 : f32 to vector<8x1xf32>
    %225 = arith.select %223, %214, %224 : vector<8x1xi1>, vector<8x1xf32>
    %226 = arith.maximumf %208, %225 : vector<8x1xf32>
    %227 = vector.broadcast %214 : vector<8x1xf32> to vector<8x128xf32>
    %228 = arith.cmpf olt, %44, %227 : vector<8x128xf32>
    %cst_92 = arith.constant 0xFF800000 : f32
    %229 = vector.broadcast %cst_92 : f32 to vector<8x128xf32>
    %230 = arith.select %228, %44, %229 : vector<8x128xi1>, vector<8x128xf32>
    %cst_93 = arith.constant dense<0xFF800000> : vector<8xf32>
    %231 = vector.multi_reduction <maximumf>, %230, %cst_93 [1] : vector<8x128xf32> to vector<8xf32>
    %232 = vector.shape_cast %231 : vector<8xf32> to vector<8x1xf32>
    %233 = vector.broadcast %232 : vector<8x1xf32> to vector<8x128xf32>
    %234 = arith.cmpf oge, %44, %233 : vector<8x128xf32>
    %cst_94 = arith.constant 1.000000e+00 : f32
    %cst_95 = arith.constant 0.000000e+00 : f32
    %235 = vector.broadcast %cst_94 : f32 to vector<8x128xf32>
    %236 = vector.broadcast %cst_95 : f32 to vector<8x128xf32>
    %237 = arith.select %234, %235, %236 : vector<8x128xi1>, vector<8x128xf32>
    %cst_96 = arith.constant dense<0.000000e+00> : vector<8xf32>
    %238 = vector.multi_reduction <add>, %237, %cst_96 [1] : vector<8x128xf32> to vector<8xf32>
    %239 = vector.shape_cast %238 : vector<8xf32> to vector<8x1xf32>
    %cst_97 = arith.constant 1.600000e+01 : f32
    %240 = vector.broadcast %cst_97 : f32 to vector<8x1xf32>
    %241 = arith.cmpf oge, %239, %240 : vector<8x1xf32>
    %cst_98 = arith.constant 0xFF800000 : f32
    %242 = vector.broadcast %cst_98 : f32 to vector<8x1xf32>
    %243 = arith.select %241, %232, %242 : vector<8x1xi1>, vector<8x1xf32>
    %244 = arith.maximumf %226, %243 : vector<8x1xf32>
    %245 = vector.broadcast %232 : vector<8x1xf32> to vector<8x128xf32>
    %246 = arith.cmpf olt, %44, %245 : vector<8x128xf32>
    %cst_99 = arith.constant 0xFF800000 : f32
    %247 = vector.broadcast %cst_99 : f32 to vector<8x128xf32>
    %248 = arith.select %246, %44, %247 : vector<8x128xi1>, vector<8x128xf32>
    %cst_100 = arith.constant dense<0xFF800000> : vector<8xf32>
    %249 = vector.multi_reduction <maximumf>, %248, %cst_100 [1] : vector<8x128xf32> to vector<8xf32>
    %250 = vector.shape_cast %249 : vector<8xf32> to vector<8x1xf32>
    %251 = vector.broadcast %250 : vector<8x1xf32> to vector<8x128xf32>
    %252 = arith.cmpf oge, %44, %251 : vector<8x128xf32>
    %cst_101 = arith.constant 1.000000e+00 : f32
    %cst_102 = arith.constant 0.000000e+00 : f32
    %253 = vector.broadcast %cst_101 : f32 to vector<8x128xf32>
    %254 = vector.broadcast %cst_102 : f32 to vector<8x128xf32>
    %255 = arith.select %252, %253, %254 : vector<8x128xi1>, vector<8x128xf32>
    %cst_103 = arith.constant dense<0.000000e+00> : vector<8xf32>
    %256 = vector.multi_reduction <add>, %255, %cst_103 [1] : vector<8x128xf32> to vector<8xf32>
    %257 = vector.shape_cast %256 : vector<8xf32> to vector<8x1xf32>
    %cst_104 = arith.constant 1.600000e+01 : f32
    %258 = vector.broadcast %cst_104 : f32 to vector<8x1xf32>
    %259 = arith.cmpf oge, %257, %258 : vector<8x1xf32>
    %cst_105 = arith.constant 0xFF800000 : f32
    %260 = vector.broadcast %cst_105 : f32 to vector<8x1xf32>
    %261 = arith.select %259, %250, %260 : vector<8x1xi1>, vector<8x1xf32>
    %262 = arith.maximumf %244, %261 : vector<8x1xf32>
    %263 = vector.broadcast %250 : vector<8x1xf32> to vector<8x128xf32>
    %264 = arith.cmpf olt, %44, %263 : vector<8x128xf32>
    %cst_106 = arith.constant 0xFF800000 : f32
    %265 = vector.broadcast %cst_106 : f32 to vector<8x128xf32>
    %266 = arith.select %264, %44, %265 : vector<8x128xi1>, vector<8x128xf32>
    %cst_107 = arith.constant dense<0xFF800000> : vector<8xf32>
    %267 = vector.multi_reduction <maximumf>, %266, %cst_107 [1] : vector<8x128xf32> to vector<8xf32>
    %268 = vector.shape_cast %267 : vector<8xf32> to vector<8x1xf32>
    %269 = vector.broadcast %268 : vector<8x1xf32> to vector<8x128xf32>
    %270 = arith.cmpf oge, %44, %269 : vector<8x128xf32>
    %cst_108 = arith.constant 1.000000e+00 : f32
    %cst_109 = arith.constant 0.000000e+00 : f32
    %271 = vector.broadcast %cst_108 : f32 to vector<8x128xf32>
    %272 = vector.broadcast %cst_109 : f32 to vector<8x128xf32>
    %273 = arith.select %270, %271, %272 : vector<8x128xi1>, vector<8x128xf32>
    %cst_110 = arith.constant dense<0.000000e+00> : vector<8xf32>
    %274 = vector.multi_reduction <add>, %273, %cst_110 [1] : vector<8x128xf32> to vector<8xf32>
    %275 = vector.shape_cast %274 : vector<8xf32> to vector<8x1xf32>
    %cst_111 = arith.constant 1.600000e+01 : f32
    %276 = vector.broadcast %cst_111 : f32 to vector<8x1xf32>
    %277 = arith.cmpf oge, %275, %276 : vector<8x1xf32>
    %cst_112 = arith.constant 0xFF800000 : f32
    %278 = vector.broadcast %cst_112 : f32 to vector<8x1xf32>
    %279 = arith.select %277, %268, %278 : vector<8x1xi1>, vector<8x1xf32>
    %280 = arith.maximumf %262, %279 : vector<8x1xf32>
    %281 = vector.broadcast %268 : vector<8x1xf32> to vector<8x128xf32>
    %282 = arith.cmpf olt, %44, %281 : vector<8x128xf32>
    %cst_113 = arith.constant 0xFF800000 : f32
    %283 = vector.broadcast %cst_113 : f32 to vector<8x128xf32>
    %284 = arith.select %282, %44, %283 : vector<8x128xi1>, vector<8x128xf32>
    %cst_114 = arith.constant dense<0xFF800000> : vector<8xf32>
    %285 = vector.multi_reduction <maximumf>, %284, %cst_114 [1] : vector<8x128xf32> to vector<8xf32>
    %286 = vector.shape_cast %285 : vector<8xf32> to vector<8x1xf32>
    %287 = vector.broadcast %286 : vector<8x1xf32> to vector<8x128xf32>
    %288 = arith.cmpf oge, %44, %287 : vector<8x128xf32>
    %cst_115 = arith.constant 1.000000e+00 : f32
    %cst_116 = arith.constant 0.000000e+00 : f32
    %289 = vector.broadcast %cst_115 : f32 to vector<8x128xf32>
    %290 = vector.broadcast %cst_116 : f32 to vector<8x128xf32>
    %291 = arith.select %288, %289, %290 : vector<8x128xi1>, vector<8x128xf32>
    %cst_117 = arith.constant dense<0.000000e+00> : vector<8xf32>
    %292 = vector.multi_reduction <add>, %291, %cst_117 [1] : vector<8x128xf32> to vector<8xf32>
    %293 = vector.shape_cast %292 : vector<8xf32> to vector<8x1xf32>
    %cst_118 = arith.constant 1.600000e+01 : f32
    %294 = vector.broadcast %cst_118 : f32 to vector<8x1xf32>
    %295 = arith.cmpf oge, %293, %294 : vector<8x1xf32>
    %cst_119 = arith.constant 0xFF800000 : f32
    %296 = vector.broadcast %cst_119 : f32 to vector<8x1xf32>
    %297 = arith.select %295, %286, %296 : vector<8x1xi1>, vector<8x1xf32>
    %298 = arith.maximumf %280, %297 : vector<8x1xf32>
    %299 = vector.broadcast %286 : vector<8x1xf32> to vector<8x128xf32>
    %300 = arith.cmpf olt, %44, %299 : vector<8x128xf32>
    %cst_120 = arith.constant 0xFF800000 : f32
    %301 = vector.broadcast %cst_120 : f32 to vector<8x128xf32>
    %302 = arith.select %300, %44, %301 : vector<8x128xi1>, vector<8x128xf32>
    %cst_121 = arith.constant dense<0xFF800000> : vector<8xf32>
    %303 = vector.multi_reduction <maximumf>, %302, %cst_121 [1] : vector<8x128xf32> to vector<8xf32>
    %304 = vector.shape_cast %303 : vector<8xf32> to vector<8x1xf32>
    %305 = vector.broadcast %304 : vector<8x1xf32> to vector<8x128xf32>
    %306 = arith.cmpf oge, %44, %305 : vector<8x128xf32>
    %cst_122 = arith.constant 1.000000e+00 : f32
    %cst_123 = arith.constant 0.000000e+00 : f32
    %307 = vector.broadcast %cst_122 : f32 to vector<8x128xf32>
    %308 = vector.broadcast %cst_123 : f32 to vector<8x128xf32>
    %309 = arith.select %306, %307, %308 : vector<8x128xi1>, vector<8x128xf32>
    %cst_124 = arith.constant dense<0.000000e+00> : vector<8xf32>
    %310 = vector.multi_reduction <add>, %309, %cst_124 [1] : vector<8x128xf32> to vector<8xf32>
    %311 = vector.shape_cast %310 : vector<8xf32> to vector<8x1xf32>
    %cst_125 = arith.constant 1.600000e+01 : f32
    %312 = vector.broadcast %cst_125 : f32 to vector<8x1xf32>
    %313 = arith.cmpf oge, %311, %312 : vector<8x1xf32>
    %cst_126 = arith.constant 0xFF800000 : f32
    %314 = vector.broadcast %cst_126 : f32 to vector<8x1xf32>
    %315 = arith.select %313, %304, %314 : vector<8x1xi1>, vector<8x1xf32>
    %316 = arith.maximumf %298, %315 : vector<8x1xf32>
    %317 = vector.broadcast %304 : vector<8x1xf32> to vector<8x128xf32>
    %318 = arith.cmpf olt, %44, %317 : vector<8x128xf32>
    %cst_127 = arith.constant 0xFF800000 : f32
    %319 = vector.broadcast %cst_127 : f32 to vector<8x128xf32>
    %320 = arith.select %318, %44, %319 : vector<8x128xi1>, vector<8x128xf32>
    %cst_128 = arith.constant dense<0xFF800000> : vector<8xf32>
    %321 = vector.multi_reduction <maximumf>, %320, %cst_128 [1] : vector<8x128xf32> to vector<8xf32>
    %322 = vector.shape_cast %321 : vector<8xf32> to vector<8x1xf32>
    %323 = vector.broadcast %322 : vector<8x1xf32> to vector<8x128xf32>
    %324 = arith.cmpf oge, %44, %323 : vector<8x128xf32>
    %cst_129 = arith.constant 1.000000e+00 : f32
    %cst_130 = arith.constant 0.000000e+00 : f32
    %325 = vector.broadcast %cst_129 : f32 to vector<8x128xf32>
    %326 = vector.broadcast %cst_130 : f32 to vector<8x128xf32>
    %327 = arith.select %324, %325, %326 : vector<8x128xi1>, vector<8x128xf32>
    %cst_131 = arith.constant dense<0.000000e+00> : vector<8xf32>
    %328 = vector.multi_reduction <add>, %327, %cst_131 [1] : vector<8x128xf32> to vector<8xf32>
    %329 = vector.shape_cast %328 : vector<8xf32> to vector<8x1xf32>
    %cst_132 = arith.constant 1.600000e+01 : f32
    %330 = vector.broadcast %cst_132 : f32 to vector<8x1xf32>
    %331 = arith.cmpf oge, %329, %330 : vector<8x1xf32>
    %cst_133 = arith.constant 0xFF800000 : f32
    %332 = vector.broadcast %cst_133 : f32 to vector<8x1xf32>
    %333 = arith.select %331, %322, %332 : vector<8x1xi1>, vector<8x1xf32>
    %334 = arith.maximumf %316, %333 : vector<8x1xf32>
    %335 = vector.broadcast %334 : vector<8x1xf32> to vector<8x128xf32>
    %336 = arith.cmpf oge, %44, %335 : vector<8x128xf32>
    %cst_134 = arith.constant 0.000000e+00 : f32
    %337 = vector.broadcast %cst_134 : f32 to vector<8x128xf32>
    %338 = arith.select %336, %39, %337 : vector<8x128xi1>, vector<8x128xf32>
    %c0_135 = arith.constant 0 : index
    %c0_136 = arith.constant 0 : index
    %339 = vector.load %arg8[%c0_135, %c0_136] : memref<128x128xf32, #tpu.memory_space<vmem>>, vector<128x128xf32>
    %c0_137 = arith.constant 0 : index
    %c0_138 = arith.constant 0 : index
    %340 = vector.load %arg9[%c0_137, %c0_138] : memref<1x128xf32, #tpu.memory_space<vmem>>, vector<1x128xf32>
    %c0_139 = arith.constant 0 : index
    %c0_140 = arith.constant 0 : index
    %341 = vector.load %arg10[%c0_139, %c0_140] : memref<32x512xf32, #tpu.memory_space<vmem>>, vector<32x512xf32>
    %cst_141 = arith.constant dense<0.000000e+00> : vector<8x128xf32>
    %342 = tpu.matmul %338, %339, %cst_141 {dimension_numbers = #tpu.dot_dimension_numbers<[1], [0], [0], [1], [0, 0, 1, 1], [], []>} : vector<8x128xf32>, vector<128x128xf32>, vector<8x128xf32> -> vector<8x128xf32>
    %343 = vector.broadcast %340 : vector<1x128xf32> to vector<8x128xf32>
    %344 = arith.addf %342, %343 : vector<8x128xf32>
    %cst_142 = arith.constant dense<0.000000e+00> : vector<8x512xf32>
    %345 = tpu.matmul %7, %341, %cst_142 {dimension_numbers = #tpu.dot_dimension_numbers<[1], [0], [0], [1], [0, 0, 1, 1], [], []>} : vector<8x32xf32>, vector<32x512xf32>, vector<8x512xf32> -> vector<8x512xf32>
    %346 = vector.extract_strided_slice %345 {offsets = [0, 0], sizes = [8, 128], strides = [1, 1]} : vector<8x512xf32> to vector<8x128xf32>
    %347 = math.absf %346 : vector<8x128xf32>
    %348 = vector.extract_strided_slice %345 {offsets = [0, 128], sizes = [8, 128], strides = [1, 1]} : vector<8x512xf32> to vector<8x128xf32>
    %349 = math.absf %348 : vector<8x128xf32>
    %350 = arith.cmpf ogt, %349, %347 : vector<8x128xf32>
    %351 = arith.select %350, %348, %346 : vector<8x128xi1>, vector<8x128xf32>
    %352 = arith.maximumf %349, %347 : vector<8x128xf32>
    %353 = vector.extract_strided_slice %345 {offsets = [0, 256], sizes = [8, 128], strides = [1, 1]} : vector<8x512xf32> to vector<8x128xf32>
    %354 = math.absf %353 : vector<8x128xf32>
    %355 = arith.cmpf ogt, %354, %352 : vector<8x128xf32>
    %356 = arith.select %355, %353, %351 : vector<8x128xi1>, vector<8x128xf32>
    %357 = arith.maximumf %354, %352 : vector<8x128xf32>
    %358 = vector.extract_strided_slice %345 {offsets = [0, 384], sizes = [8, 128], strides = [1, 1]} : vector<8x512xf32> to vector<8x128xf32>
    %359 = math.absf %358 : vector<8x128xf32>
    %360 = arith.cmpf ogt, %359, %357 : vector<8x128xf32>
    %361 = arith.select %360, %358, %356 : vector<8x128xi1>, vector<8x128xf32>
    %cst_143 = arith.constant 5.000000e-01 : f32
    %362 = vector.broadcast %cst_143 : f32 to vector<8x128xf32>
    %363 = arith.mulf %362, %361 : vector<8x128xf32>
    %364 = math.tanh %363 : vector<8x128xf32>
    %cst_144 = arith.constant 1.000000e+00 : f32
    %365 = vector.broadcast %cst_144 : f32 to vector<8x128xf32>
    %366 = arith.addf %364, %365 : vector<8x128xf32>
    %cst_145 = arith.constant 5.000000e-01 : f32
    %367 = vector.broadcast %cst_145 : f32 to vector<8x128xf32>
    %368 = arith.mulf %367, %366 : vector<8x128xf32>
    %369 = arith.mulf %344, %368 : vector<8x128xf32>
    %370 = tpu.iota {dimensions = array<i32: 1>} : vector<8x128xi32>
    %c64_i32_146 = arith.constant 64 : i32
    %371 = vector.broadcast %c64_i32_146 : i32 to vector<8x128xi32>
    %372 = arith.cmpi slt, %370, %371 : vector<8x128xi32>
    %cst_147 = arith.constant 0xFF800000 : f32
    %373 = vector.broadcast %cst_147 : f32 to vector<8x128xf32>
    %374 = arith.select %372, %369, %373 : vector<8x128xi1>, vector<8x128xf32>
    %cst_148 = arith.constant 0x7F800000 : f32
    %375 = vector.broadcast %cst_148 : f32 to vector<8x1xf32>
    %cst_149 = arith.constant 0xFF800000 : f32
    %376 = vector.broadcast %cst_149 : f32 to vector<8x1xf32>
    %377 = vector.broadcast %375 : vector<8x1xf32> to vector<8x128xf32>
    %378 = arith.cmpf olt, %374, %377 : vector<8x128xf32>
    %cst_150 = arith.constant 0xFF800000 : f32
    %379 = vector.broadcast %cst_150 : f32 to vector<8x128xf32>
    %380 = arith.select %378, %374, %379 : vector<8x128xi1>, vector<8x128xf32>
    %cst_151 = arith.constant dense<0xFF800000> : vector<8xf32>
    %381 = vector.multi_reduction <maximumf>, %380, %cst_151 [1] : vector<8x128xf32> to vector<8xf32>
    %382 = vector.shape_cast %381 : vector<8xf32> to vector<8x1xf32>
    %383 = vector.broadcast %382 : vector<8x1xf32> to vector<8x128xf32>
    %384 = arith.cmpf oge, %374, %383 : vector<8x128xf32>
    %cst_152 = arith.constant 1.000000e+00 : f32
    %cst_153 = arith.constant 0.000000e+00 : f32
    %385 = vector.broadcast %cst_152 : f32 to vector<8x128xf32>
    %386 = vector.broadcast %cst_153 : f32 to vector<8x128xf32>
    %387 = arith.select %384, %385, %386 : vector<8x128xi1>, vector<8x128xf32>
    %cst_154 = arith.constant dense<0.000000e+00> : vector<8xf32>
    %388 = vector.multi_reduction <add>, %387, %cst_154 [1] : vector<8x128xf32> to vector<8xf32>
    %389 = vector.shape_cast %388 : vector<8xf32> to vector<8x1xf32>
    %cst_155 = arith.constant 1.600000e+01 : f32
    %390 = vector.broadcast %cst_155 : f32 to vector<8x1xf32>
    %391 = arith.cmpf oge, %389, %390 : vector<8x1xf32>
    %cst_156 = arith.constant 0xFF800000 : f32
    %392 = vector.broadcast %cst_156 : f32 to vector<8x1xf32>
    %393 = arith.select %391, %382, %392 : vector<8x1xi1>, vector<8x1xf32>
    %394 = arith.maximumf %376, %393 : vector<8x1xf32>
    %395 = vector.broadcast %382 : vector<8x1xf32> to vector<8x128xf32>
    %396 = arith.cmpf olt, %374, %395 : vector<8x128xf32>
    %cst_157 = arith.constant 0xFF800000 : f32
    %397 = vector.broadcast %cst_157 : f32 to vector<8x128xf32>
    %398 = arith.select %396, %374, %397 : vector<8x128xi1>, vector<8x128xf32>
    %cst_158 = arith.constant dense<0xFF800000> : vector<8xf32>
    %399 = vector.multi_reduction <maximumf>, %398, %cst_158 [1] : vector<8x128xf32> to vector<8xf32>
    %400 = vector.shape_cast %399 : vector<8xf32> to vector<8x1xf32>
    %401 = vector.broadcast %400 : vector<8x1xf32> to vector<8x128xf32>
    %402 = arith.cmpf oge, %374, %401 : vector<8x128xf32>
    %cst_159 = arith.constant 1.000000e+00 : f32
    %cst_160 = arith.constant 0.000000e+00 : f32
    %403 = vector.broadcast %cst_159 : f32 to vector<8x128xf32>
    %404 = vector.broadcast %cst_160 : f32 to vector<8x128xf32>
    %405 = arith.select %402, %403, %404 : vector<8x128xi1>, vector<8x128xf32>
    %cst_161 = arith.constant dense<0.000000e+00> : vector<8xf32>
    %406 = vector.multi_reduction <add>, %405, %cst_161 [1] : vector<8x128xf32> to vector<8xf32>
    %407 = vector.shape_cast %406 : vector<8xf32> to vector<8x1xf32>
    %cst_162 = arith.constant 1.600000e+01 : f32
    %408 = vector.broadcast %cst_162 : f32 to vector<8x1xf32>
    %409 = arith.cmpf oge, %407, %408 : vector<8x1xf32>
    %cst_163 = arith.constant 0xFF800000 : f32
    %410 = vector.broadcast %cst_163 : f32 to vector<8x1xf32>
    %411 = arith.select %409, %400, %410 : vector<8x1xi1>, vector<8x1xf32>
    %412 = arith.maximumf %394, %411 : vector<8x1xf32>
    %413 = vector.broadcast %400 : vector<8x1xf32> to vector<8x128xf32>
    %414 = arith.cmpf olt, %374, %413 : vector<8x128xf32>
    %cst_164 = arith.constant 0xFF800000 : f32
    %415 = vector.broadcast %cst_164 : f32 to vector<8x128xf32>
    %416 = arith.select %414, %374, %415 : vector<8x128xi1>, vector<8x128xf32>
    %cst_165 = arith.constant dense<0xFF800000> : vector<8xf32>
    %417 = vector.multi_reduction <maximumf>, %416, %cst_165 [1] : vector<8x128xf32> to vector<8xf32>
    %418 = vector.shape_cast %417 : vector<8xf32> to vector<8x1xf32>
    %419 = vector.broadcast %418 : vector<8x1xf32> to vector<8x128xf32>
    %420 = arith.cmpf oge, %374, %419 : vector<8x128xf32>
    %cst_166 = arith.constant 1.000000e+00 : f32
    %cst_167 = arith.constant 0.000000e+00 : f32
    %421 = vector.broadcast %cst_166 : f32 to vector<8x128xf32>
    %422 = vector.broadcast %cst_167 : f32 to vector<8x128xf32>
    %423 = arith.select %420, %421, %422 : vector<8x128xi1>, vector<8x128xf32>
    %cst_168 = arith.constant dense<0.000000e+00> : vector<8xf32>
    %424 = vector.multi_reduction <add>, %423, %cst_168 [1] : vector<8x128xf32> to vector<8xf32>
    %425 = vector.shape_cast %424 : vector<8xf32> to vector<8x1xf32>
    %cst_169 = arith.constant 1.600000e+01 : f32
    %426 = vector.broadcast %cst_169 : f32 to vector<8x1xf32>
    %427 = arith.cmpf oge, %425, %426 : vector<8x1xf32>
    %cst_170 = arith.constant 0xFF800000 : f32
    %428 = vector.broadcast %cst_170 : f32 to vector<8x1xf32>
    %429 = arith.select %427, %418, %428 : vector<8x1xi1>, vector<8x1xf32>
    %430 = arith.maximumf %412, %429 : vector<8x1xf32>
    %431 = vector.broadcast %418 : vector<8x1xf32> to vector<8x128xf32>
    %432 = arith.cmpf olt, %374, %431 : vector<8x128xf32>
    %cst_171 = arith.constant 0xFF800000 : f32
    %433 = vector.broadcast %cst_171 : f32 to vector<8x128xf32>
    %434 = arith.select %432, %374, %433 : vector<8x128xi1>, vector<8x128xf32>
    %cst_172 = arith.constant dense<0xFF800000> : vector<8xf32>
    %435 = vector.multi_reduction <maximumf>, %434, %cst_172 [1] : vector<8x128xf32> to vector<8xf32>
    %436 = vector.shape_cast %435 : vector<8xf32> to vector<8x1xf32>
    %437 = vector.broadcast %436 : vector<8x1xf32> to vector<8x128xf32>
    %438 = arith.cmpf oge, %374, %437 : vector<8x128xf32>
    %cst_173 = arith.constant 1.000000e+00 : f32
    %cst_174 = arith.constant 0.000000e+00 : f32
    %439 = vector.broadcast %cst_173 : f32 to vector<8x128xf32>
    %440 = vector.broadcast %cst_174 : f32 to vector<8x128xf32>
    %441 = arith.select %438, %439, %440 : vector<8x128xi1>, vector<8x128xf32>
    %cst_175 = arith.constant dense<0.000000e+00> : vector<8xf32>
    %442 = vector.multi_reduction <add>, %441, %cst_175 [1] : vector<8x128xf32> to vector<8xf32>
    %443 = vector.shape_cast %442 : vector<8xf32> to vector<8x1xf32>
    %cst_176 = arith.constant 1.600000e+01 : f32
    %444 = vector.broadcast %cst_176 : f32 to vector<8x1xf32>
    %445 = arith.cmpf oge, %443, %444 : vector<8x1xf32>
    %cst_177 = arith.constant 0xFF800000 : f32
    %446 = vector.broadcast %cst_177 : f32 to vector<8x1xf32>
    %447 = arith.select %445, %436, %446 : vector<8x1xi1>, vector<8x1xf32>
    %448 = arith.maximumf %430, %447 : vector<8x1xf32>
    %449 = vector.broadcast %436 : vector<8x1xf32> to vector<8x128xf32>
    %450 = arith.cmpf olt, %374, %449 : vector<8x128xf32>
    %cst_178 = arith.constant 0xFF800000 : f32
    %451 = vector.broadcast %cst_178 : f32 to vector<8x128xf32>
    %452 = arith.select %450, %374, %451 : vector<8x128xi1>, vector<8x128xf32>
    %cst_179 = arith.constant dense<0xFF800000> : vector<8xf32>
    %453 = vector.multi_reduction <maximumf>, %452, %cst_179 [1] : vector<8x128xf32> to vector<8xf32>
    %454 = vector.shape_cast %453 : vector<8xf32> to vector<8x1xf32>
    %455 = vector.broadcast %454 : vector<8x1xf32> to vector<8x128xf32>
    %456 = arith.cmpf oge, %374, %455 : vector<8x128xf32>
    %cst_180 = arith.constant 1.000000e+00 : f32
    %cst_181 = arith.constant 0.000000e+00 : f32
    %457 = vector.broadcast %cst_180 : f32 to vector<8x128xf32>
    %458 = vector.broadcast %cst_181 : f32 to vector<8x128xf32>
    %459 = arith.select %456, %457, %458 : vector<8x128xi1>, vector<8x128xf32>
    %cst_182 = arith.constant dense<0.000000e+00> : vector<8xf32>
    %460 = vector.multi_reduction <add>, %459, %cst_182 [1] : vector<8x128xf32> to vector<8xf32>
    %461 = vector.shape_cast %460 : vector<8xf32> to vector<8x1xf32>
    %cst_183 = arith.constant 1.600000e+01 : f32
    %462 = vector.broadcast %cst_183 : f32 to vector<8x1xf32>
    %463 = arith.cmpf oge, %461, %462 : vector<8x1xf32>
    %cst_184 = arith.constant 0xFF800000 : f32
    %464 = vector.broadcast %cst_184 : f32 to vector<8x1xf32>
    %465 = arith.select %463, %454, %464 : vector<8x1xi1>, vector<8x1xf32>
    %466 = arith.maximumf %448, %465 : vector<8x1xf32>
    %467 = vector.broadcast %454 : vector<8x1xf32> to vector<8x128xf32>
    %468 = arith.cmpf olt, %374, %467 : vector<8x128xf32>
    %cst_185 = arith.constant 0xFF800000 : f32
    %469 = vector.broadcast %cst_185 : f32 to vector<8x128xf32>
    %470 = arith.select %468, %374, %469 : vector<8x128xi1>, vector<8x128xf32>
    %cst_186 = arith.constant dense<0xFF800000> : vector<8xf32>
    %471 = vector.multi_reduction <maximumf>, %470, %cst_186 [1] : vector<8x128xf32> to vector<8xf32>
    %472 = vector.shape_cast %471 : vector<8xf32> to vector<8x1xf32>
    %473 = vector.broadcast %472 : vector<8x1xf32> to vector<8x128xf32>
    %474 = arith.cmpf oge, %374, %473 : vector<8x128xf32>
    %cst_187 = arith.constant 1.000000e+00 : f32
    %cst_188 = arith.constant 0.000000e+00 : f32
    %475 = vector.broadcast %cst_187 : f32 to vector<8x128xf32>
    %476 = vector.broadcast %cst_188 : f32 to vector<8x128xf32>
    %477 = arith.select %474, %475, %476 : vector<8x128xi1>, vector<8x128xf32>
    %cst_189 = arith.constant dense<0.000000e+00> : vector<8xf32>
    %478 = vector.multi_reduction <add>, %477, %cst_189 [1] : vector<8x128xf32> to vector<8xf32>
    %479 = vector.shape_cast %478 : vector<8xf32> to vector<8x1xf32>
    %cst_190 = arith.constant 1.600000e+01 : f32
    %480 = vector.broadcast %cst_190 : f32 to vector<8x1xf32>
    %481 = arith.cmpf oge, %479, %480 : vector<8x1xf32>
    %cst_191 = arith.constant 0xFF800000 : f32
    %482 = vector.broadcast %cst_191 : f32 to vector<8x1xf32>
    %483 = arith.select %481, %472, %482 : vector<8x1xi1>, vector<8x1xf32>
    %484 = arith.maximumf %466, %483 : vector<8x1xf32>
    %485 = vector.broadcast %472 : vector<8x1xf32> to vector<8x128xf32>
    %486 = arith.cmpf olt, %374, %485 : vector<8x128xf32>
    %cst_192 = arith.constant 0xFF800000 : f32
    %487 = vector.broadcast %cst_192 : f32 to vector<8x128xf32>
    %488 = arith.select %486, %374, %487 : vector<8x128xi1>, vector<8x128xf32>
    %cst_193 = arith.constant dense<0xFF800000> : vector<8xf32>
    %489 = vector.multi_reduction <maximumf>, %488, %cst_193 [1] : vector<8x128xf32> to vector<8xf32>
    %490 = vector.shape_cast %489 : vector<8xf32> to vector<8x1xf32>
    %491 = vector.broadcast %490 : vector<8x1xf32> to vector<8x128xf32>
    %492 = arith.cmpf oge, %374, %491 : vector<8x128xf32>
    %cst_194 = arith.constant 1.000000e+00 : f32
    %cst_195 = arith.constant 0.000000e+00 : f32
    %493 = vector.broadcast %cst_194 : f32 to vector<8x128xf32>
    %494 = vector.broadcast %cst_195 : f32 to vector<8x128xf32>
    %495 = arith.select %492, %493, %494 : vector<8x128xi1>, vector<8x128xf32>
    %cst_196 = arith.constant dense<0.000000e+00> : vector<8xf32>
    %496 = vector.multi_reduction <add>, %495, %cst_196 [1] : vector<8x128xf32> to vector<8xf32>
    %497 = vector.shape_cast %496 : vector<8xf32> to vector<8x1xf32>
    %cst_197 = arith.constant 1.600000e+01 : f32
    %498 = vector.broadcast %cst_197 : f32 to vector<8x1xf32>
    %499 = arith.cmpf oge, %497, %498 : vector<8x1xf32>
    %cst_198 = arith.constant 0xFF800000 : f32
    %500 = vector.broadcast %cst_198 : f32 to vector<8x1xf32>
    %501 = arith.select %499, %490, %500 : vector<8x1xi1>, vector<8x1xf32>
    %502 = arith.maximumf %484, %501 : vector<8x1xf32>
    %503 = vector.broadcast %490 : vector<8x1xf32> to vector<8x128xf32>
    %504 = arith.cmpf olt, %374, %503 : vector<8x128xf32>
    %cst_199 = arith.constant 0xFF800000 : f32
    %505 = vector.broadcast %cst_199 : f32 to vector<8x128xf32>
    %506 = arith.select %504, %374, %505 : vector<8x128xi1>, vector<8x128xf32>
    %cst_200 = arith.constant dense<0xFF800000> : vector<8xf32>
    %507 = vector.multi_reduction <maximumf>, %506, %cst_200 [1] : vector<8x128xf32> to vector<8xf32>
    %508 = vector.shape_cast %507 : vector<8xf32> to vector<8x1xf32>
    %509 = vector.broadcast %508 : vector<8x1xf32> to vector<8x128xf32>
    %510 = arith.cmpf oge, %374, %509 : vector<8x128xf32>
    %cst_201 = arith.constant 1.000000e+00 : f32
    %cst_202 = arith.constant 0.000000e+00 : f32
    %511 = vector.broadcast %cst_201 : f32 to vector<8x128xf32>
    %512 = vector.broadcast %cst_202 : f32 to vector<8x128xf32>
    %513 = arith.select %510, %511, %512 : vector<8x128xi1>, vector<8x128xf32>
    %cst_203 = arith.constant dense<0.000000e+00> : vector<8xf32>
    %514 = vector.multi_reduction <add>, %513, %cst_203 [1] : vector<8x128xf32> to vector<8xf32>
    %515 = vector.shape_cast %514 : vector<8xf32> to vector<8x1xf32>
    %cst_204 = arith.constant 1.600000e+01 : f32
    %516 = vector.broadcast %cst_204 : f32 to vector<8x1xf32>
    %517 = arith.cmpf oge, %515, %516 : vector<8x1xf32>
    %cst_205 = arith.constant 0xFF800000 : f32
    %518 = vector.broadcast %cst_205 : f32 to vector<8x1xf32>
    %519 = arith.select %517, %508, %518 : vector<8x1xi1>, vector<8x1xf32>
    %520 = arith.maximumf %502, %519 : vector<8x1xf32>
    %521 = vector.broadcast %508 : vector<8x1xf32> to vector<8x128xf32>
    %522 = arith.cmpf olt, %374, %521 : vector<8x128xf32>
    %cst_206 = arith.constant 0xFF800000 : f32
    %523 = vector.broadcast %cst_206 : f32 to vector<8x128xf32>
    %524 = arith.select %522, %374, %523 : vector<8x128xi1>, vector<8x128xf32>
    %cst_207 = arith.constant dense<0xFF800000> : vector<8xf32>
    %525 = vector.multi_reduction <maximumf>, %524, %cst_207 [1] : vector<8x128xf32> to vector<8xf32>
    %526 = vector.shape_cast %525 : vector<8xf32> to vector<8x1xf32>
    %527 = vector.broadcast %526 : vector<8x1xf32> to vector<8x128xf32>
    %528 = arith.cmpf oge, %374, %527 : vector<8x128xf32>
    %cst_208 = arith.constant 1.000000e+00 : f32
    %cst_209 = arith.constant 0.000000e+00 : f32
    %529 = vector.broadcast %cst_208 : f32 to vector<8x128xf32>
    %530 = vector.broadcast %cst_209 : f32 to vector<8x128xf32>
    %531 = arith.select %528, %529, %530 : vector<8x128xi1>, vector<8x128xf32>
    %cst_210 = arith.constant dense<0.000000e+00> : vector<8xf32>
    %532 = vector.multi_reduction <add>, %531, %cst_210 [1] : vector<8x128xf32> to vector<8xf32>
    %533 = vector.shape_cast %532 : vector<8xf32> to vector<8x1xf32>
    %cst_211 = arith.constant 1.600000e+01 : f32
    %534 = vector.broadcast %cst_211 : f32 to vector<8x1xf32>
    %535 = arith.cmpf oge, %533, %534 : vector<8x1xf32>
    %cst_212 = arith.constant 0xFF800000 : f32
    %536 = vector.broadcast %cst_212 : f32 to vector<8x1xf32>
    %537 = arith.select %535, %526, %536 : vector<8x1xi1>, vector<8x1xf32>
    %538 = arith.maximumf %520, %537 : vector<8x1xf32>
    %539 = vector.broadcast %526 : vector<8x1xf32> to vector<8x128xf32>
    %540 = arith.cmpf olt, %374, %539 : vector<8x128xf32>
    %cst_213 = arith.constant 0xFF800000 : f32
    %541 = vector.broadcast %cst_213 : f32 to vector<8x128xf32>
    %542 = arith.select %540, %374, %541 : vector<8x128xi1>, vector<8x128xf32>
    %cst_214 = arith.constant dense<0xFF800000> : vector<8xf32>
    %543 = vector.multi_reduction <maximumf>, %542, %cst_214 [1] : vector<8x128xf32> to vector<8xf32>
    %544 = vector.shape_cast %543 : vector<8xf32> to vector<8x1xf32>
    %545 = vector.broadcast %544 : vector<8x1xf32> to vector<8x128xf32>
    %546 = arith.cmpf oge, %374, %545 : vector<8x128xf32>
    %cst_215 = arith.constant 1.000000e+00 : f32
    %cst_216 = arith.constant 0.000000e+00 : f32
    %547 = vector.broadcast %cst_215 : f32 to vector<8x128xf32>
    %548 = vector.broadcast %cst_216 : f32 to vector<8x128xf32>
    %549 = arith.select %546, %547, %548 : vector<8x128xi1>, vector<8x128xf32>
    %cst_217 = arith.constant dense<0.000000e+00> : vector<8xf32>
    %550 = vector.multi_reduction <add>, %549, %cst_217 [1] : vector<8x128xf32> to vector<8xf32>
    %551 = vector.shape_cast %550 : vector<8xf32> to vector<8x1xf32>
    %cst_218 = arith.constant 1.600000e+01 : f32
    %552 = vector.broadcast %cst_218 : f32 to vector<8x1xf32>
    %553 = arith.cmpf oge, %551, %552 : vector<8x1xf32>
    %cst_219 = arith.constant 0xFF800000 : f32
    %554 = vector.broadcast %cst_219 : f32 to vector<8x1xf32>
    %555 = arith.select %553, %544, %554 : vector<8x1xi1>, vector<8x1xf32>
    %556 = arith.maximumf %538, %555 : vector<8x1xf32>
    %557 = vector.broadcast %544 : vector<8x1xf32> to vector<8x128xf32>
    %558 = arith.cmpf olt, %374, %557 : vector<8x128xf32>
    %cst_220 = arith.constant 0xFF800000 : f32
    %559 = vector.broadcast %cst_220 : f32 to vector<8x128xf32>
    %560 = arith.select %558, %374, %559 : vector<8x128xi1>, vector<8x128xf32>
    %cst_221 = arith.constant dense<0xFF800000> : vector<8xf32>
    %561 = vector.multi_reduction <maximumf>, %560, %cst_221 [1] : vector<8x128xf32> to vector<8xf32>
    %562 = vector.shape_cast %561 : vector<8xf32> to vector<8x1xf32>
    %563 = vector.broadcast %562 : vector<8x1xf32> to vector<8x128xf32>
    %564 = arith.cmpf oge, %374, %563 : vector<8x128xf32>
    %cst_222 = arith.constant 1.000000e+00 : f32
    %cst_223 = arith.constant 0.000000e+00 : f32
    %565 = vector.broadcast %cst_222 : f32 to vector<8x128xf32>
    %566 = vector.broadcast %cst_223 : f32 to vector<8x128xf32>
    %567 = arith.select %564, %565, %566 : vector<8x128xi1>, vector<8x128xf32>
    %cst_224 = arith.constant dense<0.000000e+00> : vector<8xf32>
    %568 = vector.multi_reduction <add>, %567, %cst_224 [1] : vector<8x128xf32> to vector<8xf32>
    %569 = vector.shape_cast %568 : vector<8xf32> to vector<8x1xf32>
    %cst_225 = arith.constant 1.600000e+01 : f32
    %570 = vector.broadcast %cst_225 : f32 to vector<8x1xf32>
    %571 = arith.cmpf oge, %569, %570 : vector<8x1xf32>
    %cst_226 = arith.constant 0xFF800000 : f32
    %572 = vector.broadcast %cst_226 : f32 to vector<8x1xf32>
    %573 = arith.select %571, %562, %572 : vector<8x1xi1>, vector<8x1xf32>
    %574 = arith.maximumf %556, %573 : vector<8x1xf32>
    %575 = vector.broadcast %562 : vector<8x1xf32> to vector<8x128xf32>
    %576 = arith.cmpf olt, %374, %575 : vector<8x128xf32>
    %cst_227 = arith.constant 0xFF800000 : f32
    %577 = vector.broadcast %cst_227 : f32 to vector<8x128xf32>
    %578 = arith.select %576, %374, %577 : vector<8x128xi1>, vector<8x128xf32>
    %cst_228 = arith.constant dense<0xFF800000> : vector<8xf32>
    %579 = vector.multi_reduction <maximumf>, %578, %cst_228 [1] : vector<8x128xf32> to vector<8xf32>
    %580 = vector.shape_cast %579 : vector<8xf32> to vector<8x1xf32>
    %581 = vector.broadcast %580 : vector<8x1xf32> to vector<8x128xf32>
    %582 = arith.cmpf oge, %374, %581 : vector<8x128xf32>
    %cst_229 = arith.constant 1.000000e+00 : f32
    %cst_230 = arith.constant 0.000000e+00 : f32
    %583 = vector.broadcast %cst_229 : f32 to vector<8x128xf32>
    %584 = vector.broadcast %cst_230 : f32 to vector<8x128xf32>
    %585 = arith.select %582, %583, %584 : vector<8x128xi1>, vector<8x128xf32>
    %cst_231 = arith.constant dense<0.000000e+00> : vector<8xf32>
    %586 = vector.multi_reduction <add>, %585, %cst_231 [1] : vector<8x128xf32> to vector<8xf32>
    %587 = vector.shape_cast %586 : vector<8xf32> to vector<8x1xf32>
    %cst_232 = arith.constant 1.600000e+01 : f32
    %588 = vector.broadcast %cst_232 : f32 to vector<8x1xf32>
    %589 = arith.cmpf oge, %587, %588 : vector<8x1xf32>
    %cst_233 = arith.constant 0xFF800000 : f32
    %590 = vector.broadcast %cst_233 : f32 to vector<8x1xf32>
    %591 = arith.select %589, %580, %590 : vector<8x1xi1>, vector<8x1xf32>
    %592 = arith.maximumf %574, %591 : vector<8x1xf32>
    %593 = vector.broadcast %580 : vector<8x1xf32> to vector<8x128xf32>
    %594 = arith.cmpf olt, %374, %593 : vector<8x128xf32>
    %cst_234 = arith.constant 0xFF800000 : f32
    %595 = vector.broadcast %cst_234 : f32 to vector<8x128xf32>
    %596 = arith.select %594, %374, %595 : vector<8x128xi1>, vector<8x128xf32>
    %cst_235 = arith.constant dense<0xFF800000> : vector<8xf32>
    %597 = vector.multi_reduction <maximumf>, %596, %cst_235 [1] : vector<8x128xf32> to vector<8xf32>
    %598 = vector.shape_cast %597 : vector<8xf32> to vector<8x1xf32>
    %599 = vector.broadcast %598 : vector<8x1xf32> to vector<8x128xf32>
    %600 = arith.cmpf oge, %374, %599 : vector<8x128xf32>
    %cst_236 = arith.constant 1.000000e+00 : f32
    %cst_237 = arith.constant 0.000000e+00 : f32
    %601 = vector.broadcast %cst_236 : f32 to vector<8x128xf32>
    %602 = vector.broadcast %cst_237 : f32 to vector<8x128xf32>
    %603 = arith.select %600, %601, %602 : vector<8x128xi1>, vector<8x128xf32>
    %cst_238 = arith.constant dense<0.000000e+00> : vector<8xf32>
    %604 = vector.multi_reduction <add>, %603, %cst_238 [1] : vector<8x128xf32> to vector<8xf32>
    %605 = vector.shape_cast %604 : vector<8xf32> to vector<8x1xf32>
    %cst_239 = arith.constant 1.600000e+01 : f32
    %606 = vector.broadcast %cst_239 : f32 to vector<8x1xf32>
    %607 = arith.cmpf oge, %605, %606 : vector<8x1xf32>
    %cst_240 = arith.constant 0xFF800000 : f32
    %608 = vector.broadcast %cst_240 : f32 to vector<8x1xf32>
    %609 = arith.select %607, %598, %608 : vector<8x1xi1>, vector<8x1xf32>
    %610 = arith.maximumf %592, %609 : vector<8x1xf32>
    %611 = vector.broadcast %598 : vector<8x1xf32> to vector<8x128xf32>
    %612 = arith.cmpf olt, %374, %611 : vector<8x128xf32>
    %cst_241 = arith.constant 0xFF800000 : f32
    %613 = vector.broadcast %cst_241 : f32 to vector<8x128xf32>
    %614 = arith.select %612, %374, %613 : vector<8x128xi1>, vector<8x128xf32>
    %cst_242 = arith.constant dense<0xFF800000> : vector<8xf32>
    %615 = vector.multi_reduction <maximumf>, %614, %cst_242 [1] : vector<8x128xf32> to vector<8xf32>
    %616 = vector.shape_cast %615 : vector<8xf32> to vector<8x1xf32>
    %617 = vector.broadcast %616 : vector<8x1xf32> to vector<8x128xf32>
    %618 = arith.cmpf oge, %374, %617 : vector<8x128xf32>
    %cst_243 = arith.constant 1.000000e+00 : f32
    %cst_244 = arith.constant 0.000000e+00 : f32
    %619 = vector.broadcast %cst_243 : f32 to vector<8x128xf32>
    %620 = vector.broadcast %cst_244 : f32 to vector<8x128xf32>
    %621 = arith.select %618, %619, %620 : vector<8x128xi1>, vector<8x128xf32>
    %cst_245 = arith.constant dense<0.000000e+00> : vector<8xf32>
    %622 = vector.multi_reduction <add>, %621, %cst_245 [1] : vector<8x128xf32> to vector<8xf32>
    %623 = vector.shape_cast %622 : vector<8xf32> to vector<8x1xf32>
    %cst_246 = arith.constant 1.600000e+01 : f32
    %624 = vector.broadcast %cst_246 : f32 to vector<8x1xf32>
    %625 = arith.cmpf oge, %623, %624 : vector<8x1xf32>
    %cst_247 = arith.constant 0xFF800000 : f32
    %626 = vector.broadcast %cst_247 : f32 to vector<8x1xf32>
    %627 = arith.select %625, %616, %626 : vector<8x1xi1>, vector<8x1xf32>
    %628 = arith.maximumf %610, %627 : vector<8x1xf32>
    %629 = vector.broadcast %616 : vector<8x1xf32> to vector<8x128xf32>
    %630 = arith.cmpf olt, %374, %629 : vector<8x128xf32>
    %cst_248 = arith.constant 0xFF800000 : f32
    %631 = vector.broadcast %cst_248 : f32 to vector<8x128xf32>
    %632 = arith.select %630, %374, %631 : vector<8x128xi1>, vector<8x128xf32>
    %cst_249 = arith.constant dense<0xFF800000> : vector<8xf32>
    %633 = vector.multi_reduction <maximumf>, %632, %cst_249 [1] : vector<8x128xf32> to vector<8xf32>
    %634 = vector.shape_cast %633 : vector<8xf32> to vector<8x1xf32>
    %635 = vector.broadcast %634 : vector<8x1xf32> to vector<8x128xf32>
    %636 = arith.cmpf oge, %374, %635 : vector<8x128xf32>
    %cst_250 = arith.constant 1.000000e+00 : f32
    %cst_251 = arith.constant 0.000000e+00 : f32
    %637 = vector.broadcast %cst_250 : f32 to vector<8x128xf32>
    %638 = vector.broadcast %cst_251 : f32 to vector<8x128xf32>
    %639 = arith.select %636, %637, %638 : vector<8x128xi1>, vector<8x128xf32>
    %cst_252 = arith.constant dense<0.000000e+00> : vector<8xf32>
    %640 = vector.multi_reduction <add>, %639, %cst_252 [1] : vector<8x128xf32> to vector<8xf32>
    %641 = vector.shape_cast %640 : vector<8xf32> to vector<8x1xf32>
    %cst_253 = arith.constant 1.600000e+01 : f32
    %642 = vector.broadcast %cst_253 : f32 to vector<8x1xf32>
    %643 = arith.cmpf oge, %641, %642 : vector<8x1xf32>
    %cst_254 = arith.constant 0xFF800000 : f32
    %644 = vector.broadcast %cst_254 : f32 to vector<8x1xf32>
    %645 = arith.select %643, %634, %644 : vector<8x1xi1>, vector<8x1xf32>
    %646 = arith.maximumf %628, %645 : vector<8x1xf32>
    %647 = vector.broadcast %634 : vector<8x1xf32> to vector<8x128xf32>
    %648 = arith.cmpf olt, %374, %647 : vector<8x128xf32>
    %cst_255 = arith.constant 0xFF800000 : f32
    %649 = vector.broadcast %cst_255 : f32 to vector<8x128xf32>
    %650 = arith.select %648, %374, %649 : vector<8x128xi1>, vector<8x128xf32>
    %cst_256 = arith.constant dense<0xFF800000> : vector<8xf32>
    %651 = vector.multi_reduction <maximumf>, %650, %cst_256 [1] : vector<8x128xf32> to vector<8xf32>
    %652 = vector.shape_cast %651 : vector<8xf32> to vector<8x1xf32>
    %653 = vector.broadcast %652 : vector<8x1xf32> to vector<8x128xf32>
    %654 = arith.cmpf oge, %374, %653 : vector<8x128xf32>
    %cst_257 = arith.constant 1.000000e+00 : f32
    %cst_258 = arith.constant 0.000000e+00 : f32
    %655 = vector.broadcast %cst_257 : f32 to vector<8x128xf32>
    %656 = vector.broadcast %cst_258 : f32 to vector<8x128xf32>
    %657 = arith.select %654, %655, %656 : vector<8x128xi1>, vector<8x128xf32>
    %cst_259 = arith.constant dense<0.000000e+00> : vector<8xf32>
    %658 = vector.multi_reduction <add>, %657, %cst_259 [1] : vector<8x128xf32> to vector<8xf32>
    %659 = vector.shape_cast %658 : vector<8xf32> to vector<8x1xf32>
    %cst_260 = arith.constant 1.600000e+01 : f32
    %660 = vector.broadcast %cst_260 : f32 to vector<8x1xf32>
    %661 = arith.cmpf oge, %659, %660 : vector<8x1xf32>
    %cst_261 = arith.constant 0xFF800000 : f32
    %662 = vector.broadcast %cst_261 : f32 to vector<8x1xf32>
    %663 = arith.select %661, %652, %662 : vector<8x1xi1>, vector<8x1xf32>
    %664 = arith.maximumf %646, %663 : vector<8x1xf32>
    %665 = vector.broadcast %664 : vector<8x1xf32> to vector<8x128xf32>
    %666 = arith.cmpf oge, %374, %665 : vector<8x128xf32>
    %cst_262 = arith.constant 0.000000e+00 : f32
    %667 = vector.broadcast %cst_262 : f32 to vector<8x128xf32>
    %668 = arith.select %666, %369, %667 : vector<8x128xi1>, vector<8x128xf32>
    %c0_263 = arith.constant 0 : index
    %c0_264 = arith.constant 0 : index
    %669 = vector.load %arg11[%c0_263, %c0_264] : memref<128x128xf32, #tpu.memory_space<vmem>>, vector<128x128xf32>
    %cst_265 = arith.constant dense<0.000000e+00> : vector<8x128xf32>
    %670 = tpu.matmul %668, %669, %cst_265 {dimension_numbers = #tpu.dot_dimension_numbers<[1], [0], [0], [1], [0, 0, 1, 1], [], []>} : vector<8x128xf32>, vector<128x128xf32>, vector<8x128xf32> -> vector<8x128xf32>
    %c0_266 = arith.constant 0 : index
    %c0_267 = arith.constant 0 : index
    %671 = vector.load %arg12[%c0_266, %c0_267] : memref<1x128xf32, #tpu.memory_space<vmem>>, vector<1x128xf32>
    %672 = vector.broadcast %671 : vector<1x128xf32> to vector<8x128xf32>
    %673 = arith.addf %670, %672 : vector<8x128xf32>
    %c0_268 = arith.constant 0 : index
    %c0_269 = arith.constant 0 : index
    %674 = vector.load %arg13[%c0_268, %c0_269] : memref<8x128xf32, #tpu.memory_space<vmem>>, vector<8x128xf32>
    tpu.vector_store %arg13[%c0_268, %c0_269], %673 {strides = array<i32>} : memref<8x128xf32, #tpu.memory_space<vmem>>, vector<8x128xf32>,
    return
  }
  func.func @transform_0(%arg0: i32) -> (i32, i32) {
    %c0_i32 = arith.constant 0 : i32
    %c0_i32_0 = arith.constant 0 : i32
    return %arg0, %c0_i32 : i32, i32
  }
  func.func @transform_1(%arg0: i32) -> (i32, i32) {
    %c0_i32 = arith.constant 0 : i32
    %c0_i32_0 = arith.constant 0 : i32
    return %arg0, %c0_i32 : i32, i32
  }
  func.func @transform_2(%arg0: i32) -> (i32, i32) {
    %c0_i32 = arith.constant 0 : i32
    %c0_i32_0 = arith.constant 0 : i32
    %c0_i32_1 = arith.constant 0 : i32
    return %c0_i32, %c0_i32_0 : i32, i32
  }
  func.func @transform_3(%arg0: i32) -> (i32, i32) {
    %c0_i32 = arith.constant 0 : i32
    %c0_i32_0 = arith.constant 0 : i32
    %c0_i32_1 = arith.constant 0 : i32
    return %c0_i32, %c0_i32_0 : i32, i32
  }
  func.func @transform_4(%arg0: i32) -> (i32, i32) {
    %c0_i32 = arith.constant 0 : i32
    %c0_i32_0 = arith.constant 0 : i32
    %c0_i32_1 = arith.constant 0 : i32
    return %c0_i32, %c0_i32_0 : i32, i32
  }
  func.func @transform_5(%arg0: i32) -> (i32, i32) {
    %c0_i32 = arith.constant 0 : i32
    %c0_i32_0 = arith.constant 0 : i32
    %c0_i32_1 = arith.constant 0 : i32
    return %c0_i32, %c0_i32_0 : i32, i32
  }
  func.func @transform_6(%arg0: i32) -> (i32, i32) {
    %c0_i32 = arith.constant 0 : i32
    %c0_i32_0 = arith.constant 0 : i32
    %c0_i32_1 = arith.constant 0 : i32
    return %c0_i32, %c0_i32_0 : i32, i32
  }
  func.func @transform_7(%arg0: i32) -> (i32, i32) {
    %c0_i32 = arith.constant 0 : i32
    %c0_i32_0 = arith.constant 0 : i32
    %c0_i32_1 = arith.constant 0 : i32
    return %c0_i32, %c0_i32_0 : i32, i32
  }
  func.func @transform_8(%arg0: i32) -> (i32, i32) {
    %c0_i32 = arith.constant 0 : i32
    %c0_i32_0 = arith.constant 0 : i32
    %c0_i32_1 = arith.constant 0 : i32
    return %c0_i32, %c0_i32_0 : i32, i32
  }
  func.func @transform_9(%arg0: i32) -> (i32, i32) {
    %c0_i32 = arith.constant 0 : i32
    %c0_i32_0 = arith.constant 0 : i32
    %c0_i32_1 = arith.constant 0 : i32
    return %c0_i32, %c0_i32_0 : i32, i32
  }
  func.func @transform_10(%arg0: i32) -> (i32, i32) {
    %c0_i32 = arith.constant 0 : i32
    %c0_i32_0 = arith.constant 0 : i32
    %c0_i32_1 = arith.constant 0 : i32
    return %c0_i32, %c0_i32_0 : i32, i32
  }
  func.func @transform_11(%arg0: i32) -> (i32, i32) {
    %c0_i32 = arith.constant 0 : i32
    %c0_i32_0 = arith.constant 0 : i32
    %c0_i32_1 = arith.constant 0 : i32
    return %c0_i32, %c0_i32_0 : i32, i32
  }
  func.func @transform_12(%arg0: i32) -> (i32, i32) {
    %c0_i32 = arith.constant 0 : i32
    %c0_i32_0 = arith.constant 0 : i32
    return %arg0, %c0_i32 : i32, i32
  }
}

</mosaic_0001>

<llo_original>
// kernel: tpu_custom_call.1
$region0: #{tpu_custom_call.1}
  #allocation0 [shape = 'u32[]', space=smem, size = 0x4, offset = 0x4, fixed_abs, tag = 'smem constant byte address 0x4 - core index']
  #allocation1 [shape = 'u32[144,128]{1,0:T(1,128)}', space=vmem, size = 0x12000, scoped, tag = 'internal scratch']
  %s0 = inlined_call_operand.hbm [shape: f32[8,32], index: 0, kind: input, shape index: {}]
  %s1 = inlined_call_operand.hbm [shape: f32[8,32], index: 1, kind: input, shape index: {}]
  %s2 = inlined_call_operand.hbm [shape: f32[32,32], index: 2, kind: input, shape index: {}]
  %s3 = inlined_call_operand.vmem [shape: f32[1,32], index: 3, kind: input, shape index: {}]
  %s4 = inlined_call_operand.hbm [shape: f32[32,128], index: 4, kind: input, shape index: {}]
  %s5 = inlined_call_operand.vmem [shape: f32[1,128], index: 5, kind: input, shape index: {}]
  %s6 = inlined_call_operand.hbm [shape: f32[32,512], index: 6, kind: input, shape index: {}]
  %s7 = inlined_call_operand.hbm [shape: f32[128,128], index: 7, kind: input, shape index: {}]
  %s8 = inlined_call_operand.vmem [shape: f32[1,128], index: 8, kind: input, shape index: {}]
  %s9 = inlined_call_operand.hbm [shape: f32[32,512], index: 9, kind: input, shape index: {}]
  %s10 = inlined_call_operand.hbm [shape: f32[128,128], index: 10, kind: input, shape index: {}]
  %s11 = inlined_call_operand.vmem [shape: f32[1,128], index: 11, kind: input, shape index: {}]
  %s12 = inlined_call_operand.hbm [shape: f32[8,128], index: 12, kind: output, shape index: {}]
  %s13 = sld [smem:[#allocation0]]
  $region90: #{tpu_custom_call.1} parent=0
    _
  %s15 = ssub.s32 1, %s13
  %s16 = scalar_select 0, %s15, %s13
  $region1: #{tpu_custom_call.1} parent=0
    #allocation2 [shape = 'u8[4096]{0}', space=vmem, size = 0x1000, scoped, tag = 'input window, operand 0, single buffered']
    #allocation3 [shape = 's32[1]{0}', space=sflag, size = 0x4, scoped, tag = 'scoped memory for tpu_custom_call.1']
    #allocation4 [shape = 's32[1]{0}', space=sflag, size = 0x4, scoped, tag = 'scoped memory for tpu_custom_call.1']
    #allocation5 [shape = 'u8[4096]{0}', space=vmem, size = 0x1000, scoped, tag = 'input window, operand 1, single buffered']
    #allocation6 [shape = 's32[1]{0}', space=sflag, size = 0x4, scoped, tag = 'scoped memory for tpu_custom_call.1']
    #allocation7 [shape = 'u8[16384]{0}', space=vmem, size = 0x4000, scoped, tag = 'input window, operand 2, single buffered']
    #allocation8 [shape = 'u8[16384]{0}', space=vmem, size = 0x4000, scoped, tag = 'input window, operand 4, single buffered']
    #allocation9 [shape = 's32[1]{0}', space=sflag, size = 0x4, scoped, tag = 'scoped memory for tpu_custom_call.1']
    #allocation10 [shape = 'u8[65536]{0}', space=vmem, size = 0x10000, scoped, tag = 'input window, operand 6, single buffered']
    #allocation11 [shape = 'u8[65536]{0}', space=vmem, size = 0x10000, scoped, tag = 'input window, operand 7, single buffered']
    #allocation12 [shape = 's32[1]{0}', space=sflag, size = 0x4, scoped, tag = 'scoped memory for tpu_custom_call.1']
    #allocation13 [shape = 'u8[65536]{0}', space=vmem, size = 0x10000, scoped, tag = 'input window, operand 9, single buffered']
    #allocation14 [shape = 'u8[65536]{0}', space=vmem, size = 0x10000, scoped, tag = 'input window, operand 10, single buffered']
    #allocation15 [shape = 's32[1]{0}', space=sflag, size = 0x4, scoped, tag = 'scoped memory for tpu_custom_call.1']
    #allocation16 [shape = 'u8[4096]{0}', space=vmem, size = 0x1000, scoped, tag = 'output window, operand 0, single buffered']
    %17 = vsyncpa [#allocation3], 0
    %18 = vsyncpa [#allocation6], 0
    %19 = vsyncpa [#allocation9], 0
    %20 = vsyncpa [#allocation12], 0
    %21 = vsyncpa [#allocation15], 0
    %22 = vsyncpa [#allocation4], 0
    // Predicated region
    $region2: #{tpu_custom_call.1} parent=1 // pred_check
      _
    $region3: #{tpu_custom_call.1} parent=1 // pred_check_branch
      %24 = sbr.rel (0) target = $region5
    $region4: #{tpu_custom_call.1} parent=1 // pred_region
      %s26 = ssub.s32 128, 128
      %27 = vsyncadd [#allocation3], %s26
      %s29 = sshll.u32 [#allocation2], 4
      %s30 = int_to_ptr.vmem [resolvable:$true] %s29
      %32 = dma.hbm_to_vmem [thread:$0]  %s0, 128, %s30, [#allocation3]
    $region5: #{tpu_custom_call.1} parent=1 // pred_fallthru
      _
    // Predicated region
    $region6: #{tpu_custom_call.1} parent=1 // pred_check
      _
    $region7: #{tpu_custom_call.1} parent=1 // pred_check_branch
      %34 = sbr.rel (0) target = $region9
    $region8: #{tpu_custom_call.1} parent=1 // pred_region
      %s36 = ssub.s32 128, 128
      %37 = vsyncadd [#allocation6], %s36
      %s39 = sshll.u32 [#allocation5], 4
      %s40 = int_to_ptr.vmem [resolvable:$true] %s39
      %42 = dma.hbm_to_vmem [thread:$0]  %s1, 128, %s40, [#allocation6]
    $region9: #{tpu_custom_call.1} parent=1 // pred_fallthru
      _
    // Predicated region
    $region10: #{tpu_custom_call.1} parent=1 // pred_check
      _
    $region11: #{tpu_custom_call.1} parent=1 // pred_check_branch
      %44 = sbr.rel (0) target = $region13
    $region12: #{tpu_custom_call.1} parent=1 // pred_region
      %s46 = ssub.s32 512, 512
      %47 = vsyncadd [#allocation6], %s46
      %s48 = sshll.u32 [#allocation7], 4
      %s49 = int_to_ptr.vmem [resolvable:$true] %s48
      %54 = dma.hbm_to_vmem [thread:$0]  %s2, 512, %s49, [#allocation6], 128, 128, 8
    $region13: #{tpu_custom_call.1} parent=1 // pred_fallthru
      _
    // Predicated region
    $region14: #{tpu_custom_call.1} parent=1 // pred_check
      _
    $region15: #{tpu_custom_call.1} parent=1 // pred_check_branch
      %56 = sbr.rel (0) target = $region17
    $region16: #{tpu_custom_call.1} parent=1 // pred_region
      _
    $region17: #{tpu_custom_call.1} parent=1 // pred_fallthru
      _
    // Predicated region
    $region18: #{tpu_custom_call.1} parent=1 // pred_check
      _
    $region19: #{tpu_custom_call.1} parent=1 // pred_check_branch
      %58 = sbr.rel (0) target = $region21
    $region20: #{tpu_custom_call.1} parent=1 // pred_region
      %s60 = ssub.s32 512, 512
      %61 = vsyncadd [#allocation9], %s60
      %s62 = sshll.u32 [#allocation8], 4
      %s63 = int_to_ptr.vmem [resolvable:$true] %s62
      %68 = dma.hbm_to_vmem [thread:$0]  %s4, 512, %s63, [#allocation9], 128, 128, 8
    $region21: #{tpu_custom_call.1} parent=1 // pred_fallthru
      _
    // Predicated region
    $region22: #{tpu_custom_call.1} parent=1 // pred_check
      _
    $region23: #{tpu_custom_call.1} parent=1 // pred_check_branch
      %70 = sbr.rel (0) target = $region25
    $region24: #{tpu_custom_call.1} parent=1 // pred_region
      _
    $region25: #{tpu_custom_call.1} parent=1 // pred_fallthru
      _
    // Predicated region
    $region26: #{tpu_custom_call.1} parent=1 // pred_check
      _
    $region27: #{tpu_custom_call.1} parent=1 // pred_check_branch
      %72 = sbr.rel (0) target = $region29
    $region28: #{tpu_custom_call.1} parent=1 // pred_region
      %s74 = ssub.s32 2048, 2048
      %75 = vsyncadd [#allocation9], %s74
      %s76 = sshll.u32 [#allocation10], 4
      %s77 = int_to_ptr.vmem [resolvable:$true] %s76
      %82 = dma.hbm_to_vmem [thread:$0]  %s6, 2048, %s77, [#allocation9], 512, 512, 32
    $region29: #{tpu_custom_call.1} parent=1 // pred_fallthru
      _
    // Predicated region
    $region30: #{tpu_custom_call.1} parent=1 // pred_check
      _
    $region31: #{tpu_custom_call.1} parent=1 // pred_check_branch
      %84 = sbr.rel (0) target = $region33
    $region32: #{tpu_custom_call.1} parent=1 // pred_region
      %s86 = ssub.s32 2048, 2048
      %87 = vsyncadd [#allocation12], %s86
      %s88 = sshll.u32 [#allocation11], 4
      %s89 = int_to_ptr.vmem [resolvable:$true] %s88
      %94 = dma.hbm_to_vmem [thread:$0]  %s7, 2048, %s89, [#allocation12], 128, 128, 8
    $region33: #{tpu_custom_call.1} parent=1 // pred_fallthru
      _
    // Predicated region
    $region34: #{tpu_custom_call.1} parent=1 // pred_check
      _
    $region35: #{tpu_custom_call.1} parent=1 // pred_check_branch
      %96 = sbr.rel (0) target = $region37
    $region36: #{tpu_custom_call.1} parent=1 // pred_region
      _
    $region37: #{tpu_custom_call.1} parent=1 // pred_fallthru
      _
    // Predicated region
    $region38: #{tpu_custom_call.1} parent=1 // pred_check
      _
    $region39: #{tpu_custom_call.1} parent=1 // pred_check_branch
      %98 = sbr.rel (0) target = $region41
    $region40: #{tpu_custom_call.1} parent=1 // pred_region
      %s100 = ssub.s32 2048, 2048
      %101 = vsyncadd [#allocation12], %s100
      %s102 = sshll.u32 [#allocation13], 4
      %s103 = int_to_ptr.vmem [resolvable:$true] %s102
      %108 = dma.hbm_to_vmem [thread:$0]  %s9, 2048, %s103, [#allocation12], 512, 512, 32
    $region41: #{tpu_custom_call.1} parent=1 // pred_fallthru
      _
    // Predicated region
    $region42: #{tpu_custom_call.1} parent=1 // pred_check
      _
    $region43: #{tpu_custom_call.1} parent=1 // pred_check_branch
      %110 = sbr.rel (0) target = $region45
    $region44: #{tpu_custom_call.1} parent=1 // pred_region
      %s112 = ssub.s32 2048, 2048
      %113 = vsyncadd [#allocation15], %s112
      %s114 = sshll.u32 [#allocation14], 4
      %s115 = int_to_ptr.vmem [resolvable:$true] %s114
      %120 = dma.hbm_to_vmem [thread:$0]  %s10, 2048, %s115, [#allocation15], 128, 128, 8
    $region45: #{tpu_custom_call.1} parent=1 // pred_fallthru
      _
    // Predicated region
    $region46: #{tpu_custom_call.1} parent=1 // pred_check
      _
    $region47: #{tpu_custom_call.1} parent=1 // pred_check_branch
      %122 = sbr.rel (0) target = $region49
    $region48: #{tpu_custom_call.1} parent=1 // pred_region
      _
    $region49: #{tpu_custom_call.1} parent=1 // pred_fallthru
      _
    // Predicated region
    $region50: #{tpu_custom_call.1} parent=1 // pred_check
      _
    $region51: #{tpu_custom_call.1} parent=1 // pred_check_branch
      %124 = sbr.rel (0) target = $region53
    $region52: #{tpu_custom_call.1} parent=1 // pred_region
      %125 = dma.done [#allocation3], 128
    $region53: #{tpu_custom_call.1} parent=1 // pred_fallthru
      _
    // Predicated region
    $region54: #{tpu_custom_call.1} parent=1 // pred_check
      _
    $region55: #{tpu_custom_call.1} parent=1 // pred_check_branch
      %127 = sbr.rel (0) target = $region57
    $region56: #{tpu_custom_call.1} parent=1 // pred_region
      %128 = dma.done [#allocation6], 128
    $region57: #{tpu_custom_call.1} parent=1 // pred_fallthru
      _
    // Predicated region
    $region58: #{tpu_custom_call.1} parent=1 // pred_check
      _
    $region59: #{tpu_custom_call.1} parent=1 // pred_check_branch
      %130 = sbr.rel (0) target = $region61
    $region60: #{tpu_custom_call.1} parent=1 // pred_region
      %131 = dma.done [#allocation6], 512
    $region61: #{tpu_custom_call.1} parent=1 // pred_fallthru
      _
    // Predicated region
    $region62: #{tpu_custom_call.1} parent=1 // pred_check
      _
    $region63: #{tpu_custom_call.1} parent=1 // pred_check_branch
      %133 = sbr.rel (0) target = $region65
    $region64: #{tpu_custom_call.1} parent=1 // pred_region
      %134 = dma.done [#allocation9], 512
    $region65: #{tpu_custom_call.1} parent=1 // pred_fallthru
      _
    // Predicated region
    $region66: #{tpu_custom_call.1} parent=1 // pred_check
      _
    $region67: #{tpu_custom_call.1} parent=1 // pred_check_branch
      %136 = sbr.rel (0) target = $region69
    $region68: #{tpu_custom_call.1} parent=1 // pred_region
      %137 = dma.done [#allocation9], 2048
    $region69: #{tpu_custom_call.1} parent=1 // pred_fallthru
      _
    // Predicated region
    $region70: #{tpu_custom_call.1} parent=1 // pred_check
      _
    $region71: #{tpu_custom_call.1} parent=1 // pred_check_branch
      %139 = sbr.rel (0) target = $region73
    $region72: #{tpu_custom_call.1} parent=1 // pred_region
      %140 = dma.done [#allocation12], 2048
    $region73: #{tpu_custom_call.1} parent=1 // pred_fallthru
      _
    // Predicated region
    $region74: #{tpu_custom_call.1} parent=1 // pred_check
      _
    $region75: #{tpu_custom_call.1} parent=1 // pred_check_branch
      %142 = sbr.rel (0) target = $region77
    $region76: #{tpu_custom_call.1} parent=1 // pred_region
      %143 = dma.done [#allocation12], 2048
    $region77: #{tpu_custom_call.1} parent=1 // pred_fallthru
      _
    // Predicated region
    $region78: #{tpu_custom_call.1} parent=1 // pred_check
      _
    $region79: #{tpu_custom_call.1} parent=1 // pred_check_branch
      %145 = sbr.rel (0) target = $region81
    $region80: #{tpu_custom_call.1} parent=1 // pred_region
      %146 = dma.done [#allocation15], 2048
    $region81: #{tpu_custom_call.1} parent=1 // pred_fallthru
      _
    %v147 = vld [vmem:[#allocation5] sm:$0xff]
    %v148 = vld [vmem:[#allocation7] sm:$0xff]
    %v149 = vld [vmem:[#allocation7 + $0x8] sm:$0xff]
    %v150 = vld [vmem:[#allocation7 + $0x10] sm:$0xff]
    %v151 = vld [vmem:[#allocation7 + $0x18] sm:$0xff]
    %v152 = vld [vmem:[%s3] sm:$0x1]
    %v154 = vlaneseq
    %v155 = vshrl.u32 %v154, 7
    %v156 = vsub.s32 0, %v155
    %v157 = vrot.slane %v152, %v156
    %vm159 = vcmask 261120
    %v161 = vsel %vm159, %v147, 0
    %163 = vmatprep.subr.mxu0 0.0
    %164 = vmatpush1.msra.mxu0 %v148
    %165 = vmatprep.subr.mxu0 0.0
    %166 = vmatpush1.msra.mxu0 %v149
    %167 = vmatprep.subr.mxu0 0.0
    %168 = vmatpush1.msra.mxu0 %v150
    %169 = vmatprep.subr.mxu0 0.0
    %170 = vmatpush1.msra.mxu0 %v151
    %171 = vmatprep.subr.mxu0 0.0
    %172 = vmatpush1.msra.mxu0 0.0
    %173 = vmatprep.subr.mxu0 0.0
    %174 = vmatpush1.msra.mxu0 0.0
    %175 = vmatprep.subr.mxu0 0.0
    %176 = vmatpush1.msra.mxu0 0.0
    %177 = vmatprep.subr.mxu0 0.0
    %178 = vmatpush1.msra.mxu0 0.0
    %179 = vmatprep.subr.mxu0 0.0
    %180 = vmatpush1.msra.mxu0 0.0
    %181 = vmatprep.subr.mxu0 0.0
    %182 = vmatpush1.msra.mxu0 0.0
    %183 = vmatprep.subr.mxu0 0.0
    %184 = vmatpush1.msra.mxu0 0.0
    %185 = vmatprep.subr.mxu0 0.0
    %186 = vmatpush1.msra.mxu0 0.0
    %187 = vmatprep.subr.mxu0 0.0
    %188 = vmatpush1.msra.mxu0 0.0
    %189 = vmatprep.subr.mxu0 0.0
    %190 = vmatpush1.msra.mxu0 0.0
    %191 = vmatprep.subr.mxu0 0.0
    %192 = vmatpush1.msra.mxu0 0.0
    %193 = vmatprep.subr.mxu0 0.0
    %194 = vmatpush1.msra.mxu0 0.0
    %195 = vmatprep.subr.mxu0 0.0
    %196 = vmatpush1.msra.mxu0 0.0
    %197 = vmatprep.subr.mxu0 0.0
    %198 = vmatpush1.msra.mxu0 0.0
    %199 = vmatprep.subr.mxu0 0.0
    %200 = vmatpush1.msra.mxu0 0.0
    %201 = vmatprep.subr.mxu0 0.0
    %202 = vmatpush1.msra.mxu0 0.0
    %203 = vmatprep.subr.mxu0 0.0
    %204 = vmatpush1.msra.mxu0 0.0
    %205 = vmatprep.subr.mxu0 0.0
    %206 = vmatpush1.msra.mxu0 0.0
    %207 = vmatprep.subr.mxu0 0.0
    %208 = vmatpush1.msra.mxu0 0.0
    %209 = vmatprep.subr.mxu0 0.0
    %210 = vmatpush1.msra.mxu0 0.0
    %211 = vmatprep.subr.mxu0 0.0
    %212 = vmatpush1.msra.mxu0 0.0
    %213 = vmatprep.subr.mxu0 0.0
    %214 = vmatpush1.msra.mxu0 0.0
    %215 = vmatprep.subr.mxu0 0.0
    %216 = vmatpush1.msra.mxu0 0.0
    %217 = vmatprep.subr.mxu0 0.0
    %218 = vmatpush1.msra.mxu0 0.0
    %219 = vmatprep.subr.mxu0 0.0
    %220 = vmatpush1.msra.mxu0 0.0
    %221 = vmatprep.subr.mxu0 0.0
    %222 = vmatpush1.msra.mxu0 0.0
    %223 = vmatprep.subr.mxu0 0.0
    %224 = vmatpush1.msra.mxu0 0.0
    %225 = vmatprep.subr.mxu0 0.0
    %226 = vmatpush1.msra.mxu0 0.0
    %227 = vmatprep.mubr.f32.mxu0 0.0
    %228 = vmatmul.mubr.f32.gmra.mrb[0].mxu0 %v161
    %v229 = vpop.f32.mrb[0].mxu0
    %v230 = vadd.f32 %v157, %v229
    %v231 = vpop.f32.mrb[0].mxu0
    %232 = vdwg.mxu0
    %v233 = vmax.f32 %v230, 0.0
    %v234 = vld [vmem:[#allocation2] sm:$0xff]
    %v235 = vld [vmem:[#allocation8] sm:$0xff]
    %v236 = vld [vmem:[#allocation8 + $0x8] sm:$0xff]
    %v237 = vld [vmem:[#allocation8 + $0x10] sm:$0xff]
    %v238 = vld [vmem:[#allocation8 + $0x18] sm:$0xff]
    %v239 = vld [vmem:[%s5] sm:$0x1]
    %v240 = vld [vmem:[#allocation10] sm:$0xff]
    %v241 = vld [vmem:[#allocation10 + $0x8] sm:$0xff]
    %v242 = vld [vmem:[#allocation10 + $0x10] sm:$0xff]
    %v243 = vld [vmem:[#allocation10 + $0x18] sm:$0xff]
    %v244 = vld [vmem:[#allocation10 + $0x20] sm:$0xff]
    %v245 = vld [vmem:[#allocation10 + $0x28] sm:$0xff]
    %v246 = vld [vmem:[#allocation10 + $0x30] sm:$0xff]
    %v247 = vld [vmem:[#allocation10 + $0x38] sm:$0xff]
    %v248 = vld [vmem:[#allocation10 + $0x40] sm:$0xff]
    %v249 = vld [vmem:[#allocation10 + $0x48] sm:$0xff]
    %v250 = vld [vmem:[#allocation10 + $0x50] sm:$0xff]
    %v251 = vld [vmem:[#allocation10 + $0x58] sm:$0xff]
    %v252 = vld [vmem:[#allocation10 + $0x60] sm:$0xff]
    %v253 = vld [vmem:[#allocation10 + $0x68] sm:$0xff]
    %v254 = vld [vmem:[#allocation10 + $0x70] sm:$0xff]
    %v255 = vld [vmem:[#allocation10 + $0x78] sm:$0xff]
    %v257 = vlaneseq
    %v258 = vshrl.u32 %v257, 7
    %v259 = vsub.s32 0, %v258
    %v260 = vrot.slane %v239, %v259
    %v263 = vsel %vm159, %v234, 0
    %265 = vmatprep.subr.mxu0 0.0
    %266 = vmatpush1.msra.mxu0 %v235
    %267 = vmatprep.subr.mxu0 0.0
    %268 = vmatpush1.msra.mxu0 %v236
    %269 = vmatprep.subr.mxu0 0.0
    %270 = vmatpush1.msra.mxu0 %v237
    %271 = vmatprep.subr.mxu0 0.0
    %272 = vmatpush1.msra.mxu0 %v238
    %273 = vmatprep.subr.mxu0 0.0
    %274 = vmatpush1.msra.mxu0 0.0
    %275 = vmatprep.subr.mxu0 0.0
    %276 = vmatpush1.msra.mxu0 0.0
    %277 = vmatprep.subr.mxu0 0.0
    %278 = vmatpush1.msra.mxu0 0.0
    %279 = vmatprep.subr.mxu0 0.0
    %280 = vmatpush1.msra.mxu0 0.0
    %281 = vmatprep.subr.mxu0 0.0
    %282 = vmatpush1.msra.mxu0 0.0
    %283 = vmatprep.subr.mxu0 0.0
    %284 = vmatpush1.msra.mxu0 0.0
    %285 = vmatprep.subr.mxu0 0.0
    %286 = vmatpush1.msra.mxu0 0.0
    %287 = vmatprep.subr.mxu0 0.0
    %288 = vmatpush1.msra.mxu0 0.0
    %289 = vmatprep.subr.mxu0 0.0
    %290 = vmatpush1.msra.mxu0 0.0
    %291 = vmatprep.subr.mxu0 0.0
    %292 = vmatpush1.msra.mxu0 0.0
    %293 = vmatprep.subr.mxu0 0.0
    %294 = vmatpush1.msra.mxu0 0.0
    %295 = vmatprep.subr.mxu0 0.0
    %296 = vmatpush1.msra.mxu0 0.0
    %297 = vmatprep.subr.mxu0 0.0
    %298 = vmatpush1.msra.mxu0 0.0
    %299 = vmatprep.subr.mxu0 0.0
    %300 = vmatpush1.msra.mxu0 0.0
    %301 = vmatprep.subr.mxu0 0.0
    %302 = vmatpush1.msra.mxu0 0.0
    %303 = vmatprep.subr.mxu0 0.0
    %304 = vmatpush1.msra.mxu0 0.0
    %305 = vmatprep.subr.mxu0 0.0
    %306 = vmatpush1.msra.mxu0 0.0
    %307 = vmatprep.subr.mxu0 0.0
    %308 = vmatpush1.msra.mxu0 0.0
    %309 = vmatprep.subr.mxu0 0.0
    %310 = vmatpush1.msra.mxu0 0.0
    %311 = vmatprep.subr.mxu0 0.0
    %312 = vmatpush1.msra.mxu0 0.0
    %313 = vmatprep.subr.mxu0 0.0
    %314 = vmatpush1.msra.mxu0 0.0
    %315 = vmatprep.subr.mxu0 0.0
    %316 = vmatpush1.msra.mxu0 0.0
    %317 = vmatprep.subr.mxu0 0.0
    %318 = vmatpush1.msra.mxu0 0.0
    %319 = vmatprep.subr.mxu0 0.0
    %320 = vmatpush1.msra.mxu0 0.0
    %321 = vmatprep.subr.mxu0 0.0
    %322 = vmatpush1.msra.mxu0 0.0
    %323 = vmatprep.subr.mxu0 0.0
    %324 = vmatpush1.msra.mxu0 0.0
    %325 = vmatprep.subr.mxu0 0.0
    %326 = vmatpush1.msra.mxu0 0.0
    %327 = vmatprep.subr.mxu0 0.0
    %328 = vmatpush1.msra.mxu0 0.0
    %329 = vmatprep.mubr.f32.mxu0 0.0
    %330 = vmatmul.mubr.f32.gmra.mrb[0].mxu0 %v263
    %v331 = vpop.f32.mrb[0].mxu0
    %v332 = vadd.f32 %v260, %v331
    %v333 = vpop.f32.mrb[0].mxu0
    %334 = vdwg.mxu0
    %v336 = vsel %vm159, %v233, 0
    %338 = vmatprep.subr.mxu0 %v241
    %339 = vmatpush1.msra.mxu0 %v240
    %340 = vmatprep.subr.mxu0 %v245
    %341 = vmatpush1.msra.mxu0 %v244
    %342 = vmatprep.subr.mxu0 %v249
    %343 = vmatpush1.msra.mxu0 %v248
    %344 = vmatprep.subr.mxu0 %v253
    %345 = vmatpush1.msra.mxu0 %v252
    %346 = vmatprep.subr.mxu0 0.0
    %347 = vmatpush1.msra.mxu0 0.0
    %348 = vmatprep.subr.mxu0 0.0
    %349 = vmatpush1.msra.mxu0 0.0
    %350 = vmatprep.subr.mxu0 0.0
    %351 = vmatpush1.msra.mxu0 0.0
    %352 = vmatprep.subr.mxu0 0.0
    %353 = vmatpush1.msra.mxu0 0.0
    %354 = vmatprep.subr.mxu0 0.0
    %355 = vmatpush1.msra.mxu0 0.0
    %356 = vmatprep.subr.mxu0 0.0
    %357 = vmatpush1.msra.mxu0 0.0
    %358 = vmatprep.subr.mxu0 0.0
    %359 = vmatpush1.msra.mxu0 0.0
    %360 = vmatprep.subr.mxu0 0.0
    %361 = vmatpush1.msra.mxu0 0.0
    %362 = vmatprep.subr.mxu0 0.0
    %363 = vmatpush1.msra.mxu0 0.0
    %364 = vmatprep.subr.mxu0 0.0
    %365 = vmatpush1.msra.mxu0 0.0
    %366 = vmatprep.subr.mxu0 0.0
    %367 = vmatpush1.msra.mxu0 0.0
    %368 = vmatprep.subr.mxu0 0.0
    %369 = vmatpush1.msra.mxu0 0.0
    %370 = vmatprep.subr.mxu0 0.0
    %371 = vmatpush1.msra.mxu0 0.0
    %372 = vmatprep.subr.mxu0 0.0
    %373 = vmatpush1.msra.mxu0 0.0
    %374 = vmatprep.subr.mxu0 0.0
    %375 = vmatpush1.msra.mxu0 0.0
    %376 = vmatprep.subr.mxu0 0.0
    %377 = vmatpush1.msra.mxu0 0.0
    %378 = vmatprep.subr.mxu0 0.0
    %379 = vmatpush1.msra.mxu0 0.0
    %380 = vmatprep.subr.mxu0 0.0
    %381 = vmatpush1.msra.mxu0 0.0
    %382 = vmatprep.subr.mxu0 0.0
    %383 = vmatpush1.msra.mxu0 0.0
    %384 = vmatprep.subr.mxu0 0.0
    %385 = vmatpush1.msra.mxu0 0.0
    %386 = vmatprep.subr.mxu0 0.0
    %387 = vmatpush1.msra.mxu0 0.0
    %388 = vmatprep.subr.mxu0 0.0
    %389 = vmatpush1.msra.mxu0 0.0
    %390 = vmatprep.subr.mxu0 0.0
    %391 = vmatpush1.msra.mxu0 0.0
    %392 = vmatprep.subr.mxu0 0.0
    %393 = vmatpush1.msra.mxu0 0.0
    %394 = vmatprep.subr.mxu0 0.0
    %395 = vmatpush1.msra.mxu0 0.0
    %396 = vmatprep.subr.mxu0 0.0
    %397 = vmatpush1.msra.mxu0 0.0
    %398 = vmatprep.subr.mxu0 0.0
    %399 = vmatpush1.msra.mxu0 0.0
    %400 = vmatprep.subr.mxu0 0.0
    %401 = vmatpush1.msra.mxu0 0.0
    %402 = vmatprep.mubr.f32.mxu0 0.0
    %403 = vmatmul.mubr.f32.gmra.mrb[0].mxu0 %v336
    %v404 = vpop.f32.mrb[0].mxu0
    %v405 = vadd.f32 0.0, %v404
    %v406 = vpop.f32.mrb[0].mxu0
    %v407 = vadd.f32 0.0, %v406
    %408 = vdwg.mxu0
    %409 = vmatprep.subr.mxu0 %v243
    %410 = vmatpush1.msra.mxu0 %v242
    %411 = vmatprep.subr.mxu0 %v247
    %412 = vmatpush1.msra.mxu0 %v246
    %413 = vmatprep.subr.mxu0 %v251
    %414 = vmatpush1.msra.mxu0 %v250
    %415 = vmatprep.subr.mxu0 %v255
    %416 = vmatpush1.msra.mxu0 %v254
    %417 = vmatprep.subr.mxu0 0.0
    %418 = vmatpush1.msra.mxu0 0.0
    %419 = vmatprep.subr.mxu0 0.0
    %420 = vmatpush1.msra.mxu0 0.0
    %421 = vmatprep.subr.mxu0 0.0
    %422 = vmatpush1.msra.mxu0 0.0
    %423 = vmatprep.subr.mxu0 0.0
    %424 = vmatpush1.msra.mxu0 0.0
    %425 = vmatprep.subr.mxu0 0.0
    %426 = vmatpush1.msra.mxu0 0.0
    %427 = vmatprep.subr.mxu0 0.0
    %428 = vmatpush1.msra.mxu0 0.0
    %429 = vmatprep.subr.mxu0 0.0
    %430 = vmatpush1.msra.mxu0 0.0
    %431 = vmatprep.subr.mxu0 0.0
    %432 = vmatpush1.msra.mxu0 0.0
    %433 = vmatprep.subr.mxu0 0.0
    %434 = vmatpush1.msra.mxu0 0.0
    %435 = vmatprep.subr.mxu0 0.0
    %436 = vmatpush1.msra.mxu0 0.0
    %437 = vmatprep.subr.mxu0 0.0
    %438 = vmatpush1.msra.mxu0 0.0
    %439 = vmatprep.subr.mxu0 0.0
    %440 = vmatpush1.msra.mxu0 0.0
    %441 = vmatprep.subr.mxu0 0.0
    %442 = vmatpush1.msra.mxu0 0.0
    %443 = vmatprep.subr.mxu0 0.0
    %444 = vmatpush1.msra.mxu0 0.0
    %445 = vmatprep.subr.mxu0 0.0
    %446 = vmatpush1.msra.mxu0 0.0
    %447 = vmatprep.subr.mxu0 0.0
    %448 = vmatpush1.msra.mxu0 0.0
    %449 = vmatprep.subr.mxu0 0.0
    %450 = vmatpush1.msra.mxu0 0.0
    %451 = vmatprep.subr.mxu0 0.0
    %452 = vmatpush1.msra.mxu0 0.0
    %453 = vmatprep.subr.mxu0 0.0
    %454 = vmatpush1.msra.mxu0 0.0
    %455 = vmatprep.subr.mxu0 0.0
    %456 = vmatpush1.msra.mxu0 0.0
    %457 = vmatprep.subr.mxu0 0.0
    %458 = vmatpush1.msra.mxu0 0.0
    %459 = vmatprep.subr.mxu0 0.0
    %460 = vmatpush1.msra.mxu0 0.0
    %461 = vmatprep.subr.mxu0 0.0
    %462 = vmatpush1.msra.mxu0 0.0
    %463 = vmatprep.subr.mxu0 0.0
    %464 = vmatpush1.msra.mxu0 0.0
    %465 = vmatprep.subr.mxu0 0.0
    %466 = vmatpush1.msra.mxu0 0.0
    %467 = vmatprep.subr.mxu0 0.0
    %468 = vmatpush1.msra.mxu0 0.0
    %469 = vmatprep.subr.mxu0 0.0
    %470 = vmatpush1.msra.mxu0 0.0
    %471 = vmatprep.subr.mxu0 0.0
    %472 = vmatpush1.msra.mxu0 0.0
    %473 = vmatprep.mubr.f32.mxu0 0.0
    %474 = vmatmul.mubr.f32.gmra.mrb[0].mxu0 %v336
    %v475 = vpop.f32.mrb[0].mxu0
    %v476 = vadd.f32 0.0, %v475
    %v477 = vpop.f32.mrb[0].mxu0
    %v478 = vadd.f32 0.0, %v477
    %479 = vdwg.mxu0
    %v480 = vand.u32 2147483647, %v405
    %v481 = vand.u32 2147483647, %v407
    %vm482 = vcmp.gt.f32.partialorder %v481, %v480
    %v483 = vsel %vm482, %v407, %v405
    %v484 = vmax.f32 %v481, %v480
    %v485 = vand.u32 2147483647, %v476
    %vm486 = vcmp.gt.f32.partialorder %v485, %v484
    %v487 = vsel %vm486, %v476, %v483
    %v488 = vmax.f32 %v485, %v484
    %v489 = vand.u32 2147483647, %v478
    %vm490 = vcmp.gt.f32.partialorder %v489, %v488
    %v491 = vsel %vm490, %v478, %v487
    %v492 = vmul.f32 %v491, 0.5
    %v493 = vtanh.pop %v492
    %v494 = vadd.f32 %v493, 1.0
    %v495 = vmul.f32 %v494, 0.5
    %v496 = vmul.f32 %v332, %v495
    %v497 = vlaneseq
    %v498 = vand.u32 %v497, 127
    %vm499 = vcmp.lt.s32.totalorder %v498, 64
    %v500 = vsel %vm499, %v496, -inf
    %vm501 = vcmp.lt.f32.partialorder %v500, inf
    %v502 = vsel %vm501, %v500, -inf
    %503 = vmax.xlane.f32.xlu0 %v502
    %v504 = vpop.xlane.xlu0 %503
    %vm505 = vcmp.ge.f32.partialorder %v500, %v504
    %v506 = vsel %vm505, 1.0, 0.0
    %507 = vadd.xlane.f32.xlu0 %v506
    %v508 = vpop.xlane.xlu0 %507
    %vm509 = vcmp.ge.f32.partialorder %v508, 16.0
    %v510 = vsel %vm509, %v504, -inf
    %vm511 = vcmp.lt.f32.partialorder %v500, %v504
    %v512 = vsel %vm511, %v500, -inf
    %513 = vmax.xlane.f32.xlu0 %v512
    %v514 = vpop.xlane.xlu0 %513
    %vm515 = vcmp.ge.f32.partialorder %v500, %v514
    %v516 = vsel %vm515, 1.0, 0.0
    %517 = vadd.xlane.f32.xlu0 %v516
    %v518 = vpop.xlane.xlu0 %517
    %vm519 = vcmp.ge.f32.partialorder %v518, 16.0
    %v520 = vsel %vm519, %v514, -inf
    %v521 = vmax.f32 %v510, %v520
    %vm522 = vcmp.lt.f32.partialorder %v500, %v514
    %v523 = vsel %vm522, %v500, -inf
    %524 = vmax.xlane.f32.xlu0 %v523
    %v525 = vpop.xlane.xlu0 %524
    %vm526 = vcmp.ge.f32.partialorder %v500, %v525
    %v527 = vsel %vm526, 1.0, 0.0
    %528 = vadd.xlane.f32.xlu0 %v527
    %v529 = vpop.xlane.xlu0 %528
    %vm530 = vcmp.ge.f32.partialorder %v529, 16.0
    %v531 = vsel %vm530, %v525, -inf
    %v532 = vmax.f32 %v521, %v531
    %vm533 = vcmp.lt.f32.partialorder %v500, %v525
    %v534 = vsel %vm533, %v500, -inf
    %535 = vmax.xlane.f32.xlu0 %v534
    %v536 = vpop.xlane.xlu0 %535
    %vm537 = vcmp.ge.f32.partialorder %v500, %v536
    %v538 = vsel %vm537, 1.0, 0.0
    %539 = vadd.xlane.f32.xlu0 %v538
    %v540 = vpop.xlane.xlu0 %539
    %vm541 = vcmp.ge.f32.partialorder %v540, 16.0
    %v542 = vsel %vm541, %v536, -inf
    %v543 = vmax.f32 %v532, %v542
    %vm544 = vcmp.lt.f32.partialorder %v500, %v536
    %v545 = vsel %vm544, %v500, -inf
    %546 = vmax.xlane.f32.xlu0 %v545
    %v547 = vpop.xlane.xlu0 %546
    %vm548 = vcmp.ge.f32.partialorder %v500, %v547
    %v549 = vsel %vm548, 1.0, 0.0
    %550 = vadd.xlane.f32.xlu0 %v549
    %v551 = vpop.xlane.xlu0 %550
    %vm552 = vcmp.ge.f32.partialorder %v551, 16.0
    %v553 = vsel %vm552, %v547, -inf
    %v554 = vmax.f32 %v543, %v553
    %vm555 = vcmp.lt.f32.partialorder %v500, %v547
    %v556 = vsel %vm555, %v500, -inf
    %557 = vmax.xlane.f32.xlu0 %v556
    %v558 = vpop.xlane.xlu0 %557
    %vm559 = vcmp.ge.f32.partialorder %v500, %v558
    %v560 = vsel %vm559, 1.0, 0.0
    %561 = vadd.xlane.f32.xlu0 %v560
    %v562 = vpop.xlane.xlu0 %561
    %vm563 = vcmp.ge.f32.partialorder %v562, 16.0
    %v564 = vsel %vm563, %v558, -inf
    %v565 = vmax.f32 %v554, %v564
    %vm566 = vcmp.lt.f32.partialorder %v500, %v558
    %v567 = vsel %vm566, %v500, -inf
    %568 = vmax.xlane.f32.xlu0 %v567
    %v569 = vpop.xlane.xlu0 %568
    %vm570 = vcmp.ge.f32.partialorder %v500, %v569
    %v571 = vsel %vm570, 1.0, 0.0
    %572 = vadd.xlane.f32.xlu0 %v571
    %v573 = vpop.xlane.xlu0 %572
    %vm574 = vcmp.ge.f32.partialorder %v573, 16.0
    %v575 = vsel %vm574, %v569, -inf
    %v576 = vmax.f32 %v565, %v575
    %vm577 = vcmp.lt.f32.partialorder %v500, %v569
    %v578 = vsel %vm577, %v500, -inf
    %579 = vmax.xlane.f32.xlu0 %v578
    %v580 = vpop.xlane.xlu0 %579
    %vm581 = vcmp.ge.f32.partialorder %v500, %v580
    %v582 = vsel %vm581, 1.0, 0.0
    %583 = vadd.xlane.f32.xlu0 %v582
    %v584 = vpop.xlane.xlu0 %583
    %vm585 = vcmp.ge.f32.partialorder %v584, 16.0
    %v586 = vsel %vm585, %v580, -inf
    %v587 = vmax.f32 %v576, %v586
    %vm588 = vcmp.lt.f32.partialorder %v500, %v580
    %v589 = vsel %vm588, %v500, -inf
    %590 = vmax.xlane.f32.xlu0 %v589
    %v591 = vpop.xlane.xlu0 %590
    %vm592 = vcmp.ge.f32.partialorder %v500, %v591
    %v593 = vsel %vm592, 1.0, 0.0
    %594 = vadd.xlane.f32.xlu0 %v593
    %v595 = vpop.xlane.xlu0 %594
    %vm596 = vcmp.ge.f32.partialorder %v595, 16.0
    %v597 = vsel %vm596, %v591, -inf
    %v598 = vmax.f32 %v587, %v597
    %vm599 = vcmp.lt.f32.partialorder %v500, %v591
    %v600 = vsel %vm599, %v500, -inf
    %601 = vmax.xlane.f32.xlu0 %v600
    %v602 = vpop.xlane.xlu0 %601
    %vm603 = vcmp.ge.f32.partialorder %v500, %v602
    %v604 = vsel %vm603, 1.0, 0.0
    %605 = vadd.xlane.f32.xlu0 %v604
    %v606 = vpop.xlane.xlu0 %605
    %vm607 = vcmp.ge.f32.partialorder %v606, 16.0
    %v608 = vsel %vm607, %v602, -inf
    %v609 = vmax.f32 %v598, %v608
    %vm610 = vcmp.lt.f32.partialorder %v500, %v602
    %v611 = vsel %vm610, %v500, -inf
    %612 = vmax.xlane.f32.xlu0 %v611
    %v613 = vpop.xlane.xlu0 %612
    %vm614 = vcmp.ge.f32.partialorder %v500, %v613
    %v615 = vsel %vm614, 1.0, 0.0
    %616 = vadd.xlane.f32.xlu0 %v615
    %v617 = vpop.xlane.xlu0 %616
    %vm618 = vcmp.ge.f32.partialorder %v617, 16.0
    %v619 = vsel %vm618, %v613, -inf
    %v620 = vmax.f32 %v609, %v619
    %vm621 = vcmp.lt.f32.partialorder %v500, %v613
    %v622 = vsel %vm621, %v500, -inf
    %623 = vmax.xlane.f32.xlu0 %v622
    %v624 = vpop.xlane.xlu0 %623
    %vm625 = vcmp.ge.f32.partialorder %v500, %v624
    %v626 = vsel %vm625, 1.0, 0.0
    %627 = vadd.xlane.f32.xlu0 %v626
    %v628 = vpop.xlane.xlu0 %627
    %vm629 = vcmp.ge.f32.partialorder %v628, 16.0
    %v630 = vsel %vm629, %v624, -inf
    %v631 = vmax.f32 %v620, %v630
    %vm632 = vcmp.lt.f32.partialorder %v500, %v624
    %v633 = vsel %vm632, %v500, -inf
    %634 = vmax.xlane.f32.xlu0 %v633
    %v635 = vpop.xlane.xlu0 %634
    %vm636 = vcmp.ge.f32.partialorder %v500, %v635
    %v637 = vsel %vm636, 1.0, 0.0
    %638 = vadd.xlane.f32.xlu0 %v637
    %v639 = vpop.xlane.xlu0 %638
    %vm640 = vcmp.ge.f32.partialorder %v639, 16.0
    %v641 = vsel %vm640, %v635, -inf
    %v642 = vmax.f32 %v631, %v641
    %vm643 = vcmp.lt.f32.partialorder %v500, %v635
    %v644 = vsel %vm643, %v500, -inf
    %645 = vmax.xlane.f32.xlu0 %v644
    %v646 = vpop.xlane.xlu0 %645
    %vm647 = vcmp.ge.f32.partialorder %v500, %v646
    %v648 = vsel %vm647, 1.0, 0.0
    %649 = vadd.xlane.f32.xlu0 %v648
    %v650 = vpop.xlane.xlu0 %649
    %vm651 = vcmp.ge.f32.partialorder %v650, 16.0
    %v652 = vsel %vm651, %v646, -inf
    %v653 = vmax.f32 %v642, %v652
    %vm654 = vcmp.lt.f32.partialorder %v500, %v646
    %v655 = vsel %vm654, %v500, -inf
    %656 = vmax.xlane.f32.xlu0 %v655
    %v657 = vpop.xlane.xlu0 %656
    %vm658 = vcmp.ge.f32.partialorder %v500, %v657
    %v659 = vsel %vm658, 1.0, 0.0
    %660 = vadd.xlane.f32.xlu0 %v659
    %v661 = vpop.xlane.xlu0 %660
    %vm662 = vcmp.ge.f32.partialorder %v661, 16.0
    %v663 = vsel %vm662, %v657, -inf
    %v664 = vmax.f32 %v653, %v663
    %vm665 = vcmp.lt.f32.partialorder %v500, %v657
    %v666 = vsel %vm665, %v500, -inf
    %667 = vmax.xlane.f32.xlu0 %v666
    %v668 = vpop.xlane.xlu0 %667
    %vm669 = vcmp.ge.f32.partialorder %v500, %v668
    %v670 = vsel %vm669, 1.0, 0.0
    %671 = vadd.xlane.f32.xlu0 %v670
    %v672 = vpop.xlane.xlu0 %671
    %vm673 = vcmp.ge.f32.partialorder %v672, 16.0
    %v674 = vsel %vm673, %v668, -inf
    %v675 = vmax.f32 %v664, %v674
    %vm676 = vcmp.ge.f32.partialorder %v500, %v675
    %v677 = vsel %vm676, %v496, 0.0
    %v678 = vld [vmem:[#allocation11] sm:$0xff]
    %v679 = vld [vmem:[#allocation11 + $0x8] sm:$0xff]
    %v680 = vld [vmem:[#allocation11 + $0x10] sm:$0xff]
    %v681 = vld [vmem:[#allocation11 + $0x18] sm:$0xff]
    %v682 = vld [vmem:[#allocation11 + $0x20] sm:$0xff]
    %v683 = vld [vmem:[#allocation11 + $0x28] sm:$0xff]
    %v684 = vld [vmem:[#allocation11 + $0x30] sm:$0xff]
    %v685 = vld [vmem:[#allocation11 + $0x38] sm:$0xff]
    %v686 = vld [vmem:[#allocation11 + $0x40] sm:$0xff]
    %v687 = vld [vmem:[#allocation11 + $0x48] sm:$0xff]
    %v688 = vld [vmem:[#allocation11 + $0x50] sm:$0xff]
    %v689 = vld [vmem:[#allocation11 + $0x58] sm:$0xff]
    %v690 = vld [vmem:[#allocation11 + $0x60] sm:$0xff]
    %v691 = vld [vmem:[#allocation11 + $0x68] sm:$0xff]
    %v692 = vld [vmem:[#allocation11 + $0x70] sm:$0xff]
    %v693 = vld [vmem:[#allocation11 + $0x78] sm:$0xff]
    %v694 = vld [vmem:[%s8] sm:$0x1]
    %v695 = vld [vmem:[#allocation13] sm:$0xff]
    %v696 = vld [vmem:[#allocation13 + $0x8] sm:$0xff]
    %v697 = vld [vmem:[#allocation13 + $0x10] sm:$0xff]
    %v698 = vld [vmem:[#allocation13 + $0x18] sm:$0xff]
    %v699 = vld [vmem:[#allocation13 + $0x20] sm:$0xff]
    %v700 = vld [vmem:[#allocation13 + $0x28] sm:$0xff]
    %v701 = vld [vmem:[#allocation13 + $0x30] sm:$0xff]
    %v702 = vld [vmem:[#allocation13 + $0x38] sm:$0xff]
    %v703 = vld [vmem:[#allocation13 + $0x40] sm:$0xff]
    %v704 = vld [vmem:[#allocation13 + $0x48] sm:$0xff]
    %v705 = vld [vmem:[#allocation13 + $0x50] sm:$0xff]
    %v706 = vld [vmem:[#allocation13 + $0x58] sm:$0xff]
    %v707 = vld [vmem:[#allocation13 + $0x60] sm:$0xff]
    %v708 = vld [vmem:[#allocation13 + $0x68] sm:$0xff]
    %v709 = vld [vmem:[#allocation13 + $0x70] sm:$0xff]
    %v710 = vld [vmem:[#allocation13 + $0x78] sm:$0xff]
    %v712 = vlaneseq
    %v713 = vshrl.u32 %v712, 7
    %v714 = vsub.s32 0, %v713
    %v715 = vrot.slane %v694, %v714
    %717 = vmatprep.subr.mxu0 0.0
    %718 = vmatpush1.msra.mxu0 %v678
    %719 = vmatprep.subr.mxu0 0.0
    %720 = vmatpush1.msra.mxu0 %v679
    %721 = vmatprep.subr.mxu0 0.0
    %722 = vmatpush1.msra.mxu0 %v680
    %723 = vmatprep.subr.mxu0 0.0
    %724 = vmatpush1.msra.mxu0 %v681
    %725 = vmatprep.subr.mxu0 0.0
    %726 = vmatpush1.msra.mxu0 %v682
    %727 = vmatprep.subr.mxu0 0.0
    %728 = vmatpush1.msra.mxu0 %v683
    %729 = vmatprep.subr.mxu0 0.0
    %730 = vmatpush1.msra.mxu0 %v684
    %731 = vmatprep.subr.mxu0 0.0
    %732 = vmatpush1.msra.mxu0 %v685
    %733 = vmatprep.subr.mxu0 0.0
    %734 = vmatpush1.msra.mxu0 %v686
    %735 = vmatprep.subr.mxu0 0.0
    %736 = vmatpush1.msra.mxu0 %v687
    %737 = vmatprep.subr.mxu0 0.0
    %738 = vmatpush1.msra.mxu0 %v688
    %739 = vmatprep.subr.mxu0 0.0
    %740 = vmatpush1.msra.mxu0 %v689
    %741 = vmatprep.subr.mxu0 0.0
    %742 = vmatpush1.msra.mxu0 %v690
    %743 = vmatprep.subr.mxu0 0.0
    %744 = vmatpush1.msra.mxu0 %v691
    %745 = vmatprep.subr.mxu0 0.0
    %746 = vmatpush1.msra.mxu0 %v692
    %747 = vmatprep.subr.mxu0 0.0
    %748 = vmatpush1.msra.mxu0 %v693
    %749 = vmatprep.subr.mxu0 0.0
    %750 = vmatpush1.msra.mxu0 0.0
    %751 = vmatprep.subr.mxu0 0.0
    %752 = vmatpush1.msra.mxu0 0.0
    %753 = vmatprep.subr.mxu0 0.0
    %754 = vmatpush1.msra.mxu0 0.0
    %755 = vmatprep.subr.mxu0 0.0
    %756 = vmatpush1.msra.mxu0 0.0
    %757 = vmatprep.subr.mxu0 0.0
    %758 = vmatpush1.msra.mxu0 0.0
    %759 = vmatprep.subr.mxu0 0.0
    %760 = vmatpush1.msra.mxu0 0.0
    %761 = vmatprep.subr.mxu0 0.0
    %762 = vmatpush1.msra.mxu0 0.0
    %763 = vmatprep.subr.mxu0 0.0
    %764 = vmatpush1.msra.mxu0 0.0
    %765 = vmatprep.subr.mxu0 0.0
    %766 = vmatpush1.msra.mxu0 0.0
    %767 = vmatprep.subr.mxu0 0.0
    %768 = vmatpush1.msra.mxu0 0.0
    %769 = vmatprep.subr.mxu0 0.0
    %770 = vmatpush1.msra.mxu0 0.0
    %771 = vmatprep.subr.mxu0 0.0
    %772 = vmatpush1.msra.mxu0 0.0
    %773 = vmatprep.subr.mxu0 0.0
    %774 = vmatpush1.msra.mxu0 0.0
    %775 = vmatprep.subr.mxu0 0.0
    %776 = vmatpush1.msra.mxu0 0.0
    %777 = vmatprep.subr.mxu0 0.0
    %778 = vmatpush1.msra.mxu0 0.0
    %779 = vmatprep.subr.mxu0 0.0
    %780 = vmatpush1.msra.mxu0 0.0
    %781 = vmatprep.mubr.f32.mxu0 0.0
    %782 = vmatmul.mubr.f32.gmra.mrb[0].mxu0 %v677
    %v783 = vpop.f32.mrb[0].mxu0
    %v784 = vadd.f32 %v715, %v783
    %v785 = vpop.f32.mrb[0].mxu0
    %786 = vdwg.mxu0
    %787 = vmatprep.subr.mxu0 %v696
    %788 = vmatpush1.msra.mxu0 %v695
    %789 = vmatprep.subr.mxu0 %v700
    %790 = vmatpush1.msra.mxu0 %v699
    %791 = vmatprep.subr.mxu0 %v704
    %792 = vmatpush1.msra.mxu0 %v703
    %793 = vmatprep.subr.mxu0 %v708
    %794 = vmatpush1.msra.mxu0 %v707
    %795 = vmatprep.subr.mxu0 0.0
    %796 = vmatpush1.msra.mxu0 0.0
    %797 = vmatprep.subr.mxu0 0.0
    %798 = vmatpush1.msra.mxu0 0.0
    %799 = vmatprep.subr.mxu0 0.0
    %800 = vmatpush1.msra.mxu0 0.0
    %801 = vmatprep.subr.mxu0 0.0
    %802 = vmatpush1.msra.mxu0 0.0
    %803 = vmatprep.subr.mxu0 0.0
    %804 = vmatpush1.msra.mxu0 0.0
    %805 = vmatprep.subr.mxu0 0.0
    %806 = vmatpush1.msra.mxu0 0.0
    %807 = vmatprep.subr.mxu0 0.0
    %808 = vmatpush1.msra.mxu0 0.0
    %809 = vmatprep.subr.mxu0 0.0
    %810 = vmatpush1.msra.mxu0 0.0
    %811 = vmatprep.subr.mxu0 0.0
    %812 = vmatpush1.msra.mxu0 0.0
    %813 = vmatprep.subr.mxu0 0.0
    %814 = vmatpush1.msra.mxu0 0.0
    %815 = vmatprep.subr.mxu0 0.0
    %816 = vmatpush1.msra.mxu0 0.0
    %817 = vmatprep.subr.mxu0 0.0
    %818 = vmatpush1.msra.mxu0 0.0
    %819 = vmatprep.subr.mxu0 0.0
    %820 = vmatpush1.msra.mxu0 0.0
    %821 = vmatprep.subr.mxu0 0.0
    %822 = vmatpush1.msra.mxu0 0.0
    %823 = vmatprep.subr.mxu0 0.0
    %824 = vmatpush1.msra.mxu0 0.0
    %825 = vmatprep.subr.mxu0 0.0
    %826 = vmatpush1.msra.mxu0 0.0
    %827 = vmatprep.subr.mxu0 0.0
    %828 = vmatpush1.msra.mxu0 0.0
    %829 = vmatprep.subr.mxu0 0.0
    %830 = vmatpush1.msra.mxu0 0.0
    %831 = vmatprep.subr.mxu0 0.0
    %832 = vmatpush1.msra.mxu0 0.0
    %833 = vmatprep.subr.mxu0 0.0
    %834 = vmatpush1.msra.mxu0 0.0
    %835 = vmatprep.subr.mxu0 0.0
    %836 = vmatpush1.msra.mxu0 0.0
    %837 = vmatprep.subr.mxu0 0.0
    %838 = vmatpush1.msra.mxu0 0.0
    %839 = vmatprep.subr.mxu0 0.0
    %840 = vmatpush1.msra.mxu0 0.0
    %841 = vmatprep.subr.mxu0 0.0
    %842 = vmatpush1.msra.mxu0 0.0
    %843 = vmatprep.subr.mxu0 0.0
    %844 = vmatpush1.msra.mxu0 0.0
    %845 = vmatprep.subr.mxu0 0.0
    %846 = vmatpush1.msra.mxu0 0.0
    %847 = vmatprep.subr.mxu0 0.0
    %848 = vmatpush1.msra.mxu0 0.0
    %849 = vmatprep.subr.mxu0 0.0
    %850 = vmatpush1.msra.mxu0 0.0
    %851 = vmatprep.mubr.f32.mxu0 0.0
    %852 = vmatmul.mubr.f32.gmra.mrb[0].mxu0 %v336
    %v853 = vpop.f32.mrb[0].mxu0
    %v854 = vadd.f32 0.0, %v853
    %v855 = vpop.f32.mrb[0].mxu0
    %v856 = vadd.f32 0.0, %v855
    %857 = vdwg.mxu0
    %858 = vmatprep.subr.mxu0 %v698
    %859 = vmatpush1.msra.mxu0 %v697
    %860 = vmatprep.subr.mxu0 %v702
    %861 = vmatpush1.msra.mxu0 %v701
    %862 = vmatprep.subr.mxu0 %v706
    %863 = vmatpush1.msra.mxu0 %v705
    %864 = vmatprep.subr.mxu0 %v710
    %865 = vmatpush1.msra.mxu0 %v709
    %866 = vmatprep.subr.mxu0 0.0
    %867 = vmatpush1.msra.mxu0 0.0
    %868 = vmatprep.subr.mxu0 0.0
    %869 = vmatpush1.msra.mxu0 0.0
    %870 = vmatprep.subr.mxu0 0.0
    %871 = vmatpush1.msra.mxu0 0.0
    %872 = vmatprep.subr.mxu0 0.0
    %873 = vmatpush1.msra.mxu0 0.0
    %874 = vmatprep.subr.mxu0 0.0
    %875 = vmatpush1.msra.mxu0 0.0
    %876 = vmatprep.subr.mxu0 0.0
    %877 = vmatpush1.msra.mxu0 0.0
    %878 = vmatprep.subr.mxu0 0.0
    %879 = vmatpush1.msra.mxu0 0.0
    %880 = vmatprep.subr.mxu0 0.0
    %881 = vmatpush1.msra.mxu0 0.0
    %882 = vmatprep.subr.mxu0 0.0
    %883 = vmatpush1.msra.mxu0 0.0
    %884 = vmatprep.subr.mxu0 0.0
    %885 = vmatpush1.msra.mxu0 0.0
    %886 = vmatprep.subr.mxu0 0.0
    %887 = vmatpush1.msra.mxu0 0.0
    %888 = vmatprep.subr.mxu0 0.0
    %889 = vmatpush1.msra.mxu0 0.0
    %890 = vmatprep.subr.mxu0 0.0
    %891 = vmatpush1.msra.mxu0 0.0
    %892 = vmatprep.subr.mxu0 0.0
    %893 = vmatpush1.msra.mxu0 0.0
    %894 = vmatprep.subr.mxu0 0.0
    %895 = vmatpush1.msra.mxu0 0.0
    %896 = vmatprep.subr.mxu0 0.0
    %897 = vmatpush1.msra.mxu0 0.0
    %898 = vmatprep.subr.mxu0 0.0
    %899 = vmatpush1.msra.mxu0 0.0
    %900 = vmatprep.subr.mxu0 0.0
    %901 = vmatpush1.msra.mxu0 0.0
    %902 = vmatprep.subr.mxu0 0.0
    %903 = vmatpush1.msra.mxu0 0.0
    %904 = vmatprep.subr.mxu0 0.0
    %905 = vmatpush1.msra.mxu0 0.0
    %906 = vmatprep.subr.mxu0 0.0
    %907 = vmatpush1.msra.mxu0 0.0
    %908 = vmatprep.subr.mxu0 0.0
    %909 = vmatpush1.msra.mxu0 0.0
    %910 = vmatprep.subr.mxu0 0.0
    %911 = vmatpush1.msra.mxu0 0.0
    %912 = vmatprep.subr.mxu0 0.0
    %913 = vmatpush1.msra.mxu0 0.0
    %914 = vmatprep.subr.mxu0 0.0
    %915 = vmatpush1.msra.mxu0 0.0
    %916 = vmatprep.subr.mxu0 0.0
    %917 = vmatpush1.msra.mxu0 0.0
    %918 = vmatprep.subr.mxu0 0.0
    %919 = vmatpush1.msra.mxu0 0.0
    %920 = vmatprep.subr.mxu0 0.0
    %921 = vmatpush1.msra.mxu0 0.0
    %922 = vmatprep.mubr.f32.mxu0 0.0
    %923 = vmatmul.mubr.f32.gmra.mrb[0].mxu0 %v336
    %v924 = vpop.f32.mrb[0].mxu0
    %v925 = vadd.f32 0.0, %v924
    %v926 = vpop.f32.mrb[0].mxu0
    %v927 = vadd.f32 0.0, %v926
    %928 = vdwg.mxu0
    %v929 = vand.u32 2147483647, %v854
    %v930 = vand.u32 2147483647, %v856
    %vm931 = vcmp.gt.f32.partialorder %v930, %v929
    %v932 = vsel %vm931, %v856, %v854
    %v933 = vmax.f32 %v930, %v929
    %v934 = vand.u32 2147483647, %v925
    %vm935 = vcmp.gt.f32.partialorder %v934, %v933
    %v936 = vsel %vm935, %v925, %v932
    %v937 = vmax.f32 %v934, %v933
    %v938 = vand.u32 2147483647, %v927
    %vm939 = vcmp.gt.f32.partialorder %v938, %v937
    %v940 = vsel %vm939, %v927, %v936
    %v941 = vmul.f32 %v940, 0.5
    %v942 = vtanh.pop %v941
    %v943 = vadd.f32 %v942, 1.0
    %v944 = vmul.f32 %v943, 0.5
    %v945 = vmul.f32 %v784, %v944
    %v946 = vsel %vm499, %v945, -inf
    %vm947 = vcmp.lt.f32.partialorder %v946, inf
    %v948 = vsel %vm947, %v946, -inf
    %949 = vmax.xlane.f32.xlu0 %v948
    %v950 = vpop.xlane.xlu0 %949
    %vm951 = vcmp.ge.f32.partialorder %v946, %v950
    %v952 = vsel %vm951, 1.0, 0.0
    %953 = vadd.xlane.f32.xlu0 %v952
    %v954 = vpop.xlane.xlu0 %953
    %vm955 = vcmp.ge.f32.partialorder %v954, 16.0
    %v956 = vsel %vm955, %v950, -inf
    %vm957 = vcmp.lt.f32.partialorder %v946, %v950
    %v958 = vsel %vm957, %v946, -inf
    %959 = vmax.xlane.f32.xlu0 %v958
    %v960 = vpop.xlane.xlu0 %959
    %vm961 = vcmp.ge.f32.partialorder %v946, %v960
    %v962 = vsel %vm961, 1.0, 0.0
    %963 = vadd.xlane.f32.xlu0 %v962
    %v964 = vpop.xlane.xlu0 %963
    %vm965 = vcmp.ge.f32.partialorder %v964, 16.0
    %v966 = vsel %vm965, %v960, -inf
    %v967 = vmax.f32 %v956, %v966
    %vm968 = vcmp.lt.f32.partialorder %v946, %v960
    %v969 = vsel %vm968, %v946, -inf
    %970 = vmax.xlane.f32.xlu0 %v969
    %v971 = vpop.xlane.xlu0 %970
    %vm972 = vcmp.ge.f32.partialorder %v946, %v971
    %v973 = vsel %vm972, 1.0, 0.0
    %974 = vadd.xlane.f32.xlu0 %v973
    %v975 = vpop.xlane.xlu0 %974
    %vm976 = vcmp.ge.f32.partialorder %v975, 16.0
    %v977 = vsel %vm976, %v971, -inf
    %v978 = vmax.f32 %v967, %v977
    %vm979 = vcmp.lt.f32.partialorder %v946, %v971
    %v980 = vsel %vm979, %v946, -inf
    %981 = vmax.xlane.f32.xlu0 %v980
    %v982 = vpop.xlane.xlu0 %981
    %vm983 = vcmp.ge.f32.partialorder %v946, %v982
    %v984 = vsel %vm983, 1.0, 0.0
    %985 = vadd.xlane.f32.xlu0 %v984
    %v986 = vpop.xlane.xlu0 %985
    %vm987 = vcmp.ge.f32.partialorder %v986, 16.0
    %v988 = vsel %vm987, %v982, -inf
    %v989 = vmax.f32 %v978, %v988
    %vm990 = vcmp.lt.f32.partialorder %v946, %v982
    %v991 = vsel %vm990, %v946, -inf
    %992 = vmax.xlane.f32.xlu0 %v991
    %v993 = vpop.xlane.xlu0 %992
    %vm994 = vcmp.ge.f32.partialorder %v946, %v993
    %v995 = vsel %vm994, 1.0, 0.0
    %996 = vadd.xlane.f32.xlu0 %v995
    %v997 = vpop.xlane.xlu0 %996
    %vm998 = vcmp.ge.f32.partialorder %v997, 16.0
    %v999 = vsel %vm998, %v993, -inf
    %v1000 = vmax.f32 %v989, %v999
    %vm1001 = vcmp.lt.f32.partialorder %v946, %v993
    %v1002 = vsel %vm1001, %v946, -inf
    %1003 = vmax.xlane.f32.xlu0 %v1002
    %v1004 = vpop.xlane.xlu0 %1003
    %vm1005 = vcmp.ge.f32.partialorder %v946, %v1004
    %v1006 = vsel %vm1005, 1.0, 0.0
    %1007 = vadd.xlane.f32.xlu0 %v1006
    %v1008 = vpop.xlane.xlu0 %1007
    %vm1009 = vcmp.ge.f32.partialorder %v1008, 16.0
    %v1010 = vsel %vm1009, %v1004, -inf
    %v1011 = vmax.f32 %v1000, %v1010
    %vm1012 = vcmp.lt.f32.partialorder %v946, %v1004
    %v1013 = vsel %vm1012, %v946, -inf
    %1014 = vmax.xlane.f32.xlu0 %v1013
    %v1015 = vpop.xlane.xlu0 %1014
    %vm1016 = vcmp.ge.f32.partialorder %v946, %v1015
    %v1017 = vsel %vm1016, 1.0, 0.0
    %1018 = vadd.xlane.f32.xlu0 %v1017
    %v1019 = vpop.xlane.xlu0 %1018
    %vm1020 = vcmp.ge.f32.partialorder %v1019, 16.0
    %v1021 = vsel %vm1020, %v1015, -inf
    %v1022 = vmax.f32 %v1011, %v1021
    %vm1023 = vcmp.lt.f32.partialorder %v946, %v1015
    %v1024 = vsel %vm1023, %v946, -inf
    %1025 = vmax.xlane.f32.xlu0 %v1024
    %v1026 = vpop.xlane.xlu0 %1025
    %vm1027 = vcmp.ge.f32.partialorder %v946, %v1026
    %v1028 = vsel %vm1027, 1.0, 0.0
    %1029 = vadd.xlane.f32.xlu0 %v1028
    %v1030 = vpop.xlane.xlu0 %1029
    %vm1031 = vcmp.ge.f32.partialorder %v1030, 16.0
    %v1032 = vsel %vm1031, %v1026, -inf
    %v1033 = vmax.f32 %v1022, %v1032
    %vm1034 = vcmp.lt.f32.partialorder %v946, %v1026
    %v1035 = vsel %vm1034, %v946, -inf
    %1036 = vmax.xlane.f32.xlu0 %v1035
    %v1037 = vpop.xlane.xlu0 %1036
    %vm1038 = vcmp.ge.f32.partialorder %v946, %v1037
    %v1039 = vsel %vm1038, 1.0, 0.0
    %1040 = vadd.xlane.f32.xlu0 %v1039
    %v1041 = vpop.xlane.xlu0 %1040
    %vm1042 = vcmp.ge.f32.partialorder %v1041, 16.0
    %v1043 = vsel %vm1042, %v1037, -inf
    %v1044 = vmax.f32 %v1033, %v1043
    %vm1045 = vcmp.lt.f32.partialorder %v946, %v1037
    %v1046 = vsel %vm1045, %v946, -inf
    %1047 = vmax.xlane.f32.xlu0 %v1046
    %v1048 = vpop.xlane.xlu0 %1047
    %vm1049 = vcmp.ge.f32.partialorder %v946, %v1048
    %v1050 = vsel %vm1049, 1.0, 0.0
    %1051 = vadd.xlane.f32.xlu0 %v1050
    %v1052 = vpop.xlane.xlu0 %1051
    %vm1053 = vcmp.ge.f32.partialorder %v1052, 16.0
    %v1054 = vsel %vm1053, %v1048, -inf
    %v1055 = vmax.f32 %v1044, %v1054
    %vm1056 = vcmp.lt.f32.partialorder %v946, %v1048
    %v1057 = vsel %vm1056, %v946, -inf
    %1058 = vmax.xlane.f32.xlu0 %v1057
    %v1059 = vpop.xlane.xlu0 %1058
    %vm1060 = vcmp.ge.f32.partialorder %v946, %v1059
    %v1061 = vsel %vm1060, 1.0, 0.0
    %1062 = vadd.xlane.f32.xlu0 %v1061
    %v1063 = vpop.xlane.xlu0 %1062
    %vm1064 = vcmp.ge.f32.partialorder %v1063, 16.0
    %v1065 = vsel %vm1064, %v1059, -inf
    %v1066 = vmax.f32 %v1055, %v1065
    %vm1067 = vcmp.lt.f32.partialorder %v946, %v1059
    %v1068 = vsel %vm1067, %v946, -inf
    %1069 = vmax.xlane.f32.xlu0 %v1068
    %v1070 = vpop.xlane.xlu0 %1069
    %vm1071 = vcmp.ge.f32.partialorder %v946, %v1070
    %v1072 = vsel %vm1071, 1.0, 0.0
    %1073 = vadd.xlane.f32.xlu0 %v1072
    %v1074 = vpop.xlane.xlu0 %1073
    %vm1075 = vcmp.ge.f32.partialorder %v1074, 16.0
    %v1076 = vsel %vm1075, %v1070, -inf
    %v1077 = vmax.f32 %v1066, %v1076
    %vm1078 = vcmp.lt.f32.partialorder %v946, %v1070
    %v1079 = vsel %vm1078, %v946, -inf
    %1080 = vmax.xlane.f32.xlu0 %v1079
    %v1081 = vpop.xlane.xlu0 %1080
    %vm1082 = vcmp.ge.f32.partialorder %v946, %v1081
    %v1083 = vsel %vm1082, 1.0, 0.0
    %1084 = vadd.xlane.f32.xlu0 %v1083
    %v1085 = vpop.xlane.xlu0 %1084
    %vm1086 = vcmp.ge.f32.partialorder %v1085, 16.0
    %v1087 = vsel %vm1086, %v1081, -inf
    %v1088 = vmax.f32 %v1077, %v1087
    %vm1089 = vcmp.lt.f32.partialorder %v946, %v1081
    %v1090 = vsel %vm1089, %v946, -inf
    %1091 = vmax.xlane.f32.xlu0 %v1090
    %v1092 = vpop.xlane.xlu0 %1091
    %vm1093 = vcmp.ge.f32.partialorder %v946, %v1092
    %v1094 = vsel %vm1093, 1.0, 0.0
    %1095 = vadd.xlane.f32.xlu0 %v1094
    %v1096 = vpop.xlane.xlu0 %1095
    %vm1097 = vcmp.ge.f32.partialorder %v1096, 16.0
    %v1098 = vsel %vm1097, %v1092, -inf
    %v1099 = vmax.f32 %v1088, %v1098
    %vm1100 = vcmp.lt.f32.partialorder %v946, %v1092
    %v1101 = vsel %vm1100, %v946, -inf
    %1102 = vmax.xlane.f32.xlu0 %v1101
    %v1103 = vpop.xlane.xlu0 %1102
    %vm1104 = vcmp.ge.f32.partialorder %v946, %v1103
    %v1105 = vsel %vm1104, 1.0, 0.0
    %1106 = vadd.xlane.f32.xlu0 %v1105
    %v1107 = vpop.xlane.xlu0 %1106
    %vm1108 = vcmp.ge.f32.partialorder %v1107, 16.0
    %v1109 = vsel %vm1108, %v1103, -inf
    %v1110 = vmax.f32 %v1099, %v1109
    %vm1111 = vcmp.lt.f32.partialorder %v946, %v1103
    %v1112 = vsel %vm1111, %v946, -inf
    %1113 = vmax.xlane.f32.xlu0 %v1112
    %v1114 = vpop.xlane.xlu0 %1113
    %vm1115 = vcmp.ge.f32.partialorder %v946, %v1114
    %v1116 = vsel %vm1115, 1.0, 0.0
    %1117 = vadd.xlane.f32.xlu0 %v1116
    %v1118 = vpop.xlane.xlu0 %1117
    %vm1119 = vcmp.ge.f32.partialorder %v1118, 16.0
    %v1120 = vsel %vm1119, %v1114, -inf
    %v1121 = vmax.f32 %v1110, %v1120
    %vm1122 = vcmp.ge.f32.partialorder %v946, %v1121
    %v1123 = vsel %vm1122, %v945, 0.0
    %v1124 = vld [vmem:[#allocation14] sm:$0xff]
    %v1125 = vld [vmem:[#allocation14 + $0x8] sm:$0xff]
    %v1126 = vld [vmem:[#allocation14 + $0x10] sm:$0xff]
    %v1127 = vld [vmem:[#allocation14 + $0x18] sm:$0xff]
    %v1128 = vld [vmem:[#allocation14 + $0x20] sm:$0xff]
    %v1129 = vld [vmem:[#allocation14 + $0x28] sm:$0xff]
    %v1130 = vld [vmem:[#allocation14 + $0x30] sm:$0xff]
    %v1131 = vld [vmem:[#allocation14 + $0x38] sm:$0xff]
    %v1132 = vld [vmem:[#allocation14 + $0x40] sm:$0xff]
    %v1133 = vld [vmem:[#allocation14 + $0x48] sm:$0xff]
    %v1134 = vld [vmem:[#allocation14 + $0x50] sm:$0xff]
    %v1135 = vld [vmem:[#allocation14 + $0x58] sm:$0xff]
    %v1136 = vld [vmem:[#allocation14 + $0x60] sm:$0xff]
    %v1137 = vld [vmem:[#allocation14 + $0x68] sm:$0xff]
    %v1138 = vld [vmem:[#allocation14 + $0x70] sm:$0xff]
    %v1139 = vld [vmem:[#allocation14 + $0x78] sm:$0xff]
    %v1140 = vld [vmem:[%s11] sm:$0x1]
    %v1142 = vlaneseq
    %v1143 = vshrl.u32 %v1142, 7
    %v1144 = vsub.s32 0, %v1143
    %v1145 = vrot.slane %v1140, %v1144
    %1147 = vmatprep.subr.mxu0 0.0
    %1148 = vmatpush1.msra.mxu0 %v1124
    %1149 = vmatprep.subr.mxu0 0.0
    %1150 = vmatpush1.msra.mxu0 %v1125
    %1151 = vmatprep.subr.mxu0 0.0
    %1152 = vmatpush1.msra.mxu0 %v1126
    %1153 = vmatprep.subr.mxu0 0.0
    %1154 = vmatpush1.msra.mxu0 %v1127
    %1155 = vmatprep.subr.mxu0 0.0
    %1156 = vmatpush1.msra.mxu0 %v1128
    %1157 = vmatprep.subr.mxu0 0.0
    %1158 = vmatpush1.msra.mxu0 %v1129
    %1159 = vmatprep.subr.mxu0 0.0
    %1160 = vmatpush1.msra.mxu0 %v1130
    %1161 = vmatprep.subr.mxu0 0.0
    %1162 = vmatpush1.msra.mxu0 %v1131
    %1163 = vmatprep.subr.mxu0 0.0
    %1164 = vmatpush1.msra.mxu0 %v1132
    %1165 = vmatprep.subr.mxu0 0.0
    %1166 = vmatpush1.msra.mxu0 %v1133
    %1167 = vmatprep.subr.mxu0 0.0
    %1168 = vmatpush1.msra.mxu0 %v1134
    %1169 = vmatprep.subr.mxu0 0.0
    %1170 = vmatpush1.msra.mxu0 %v1135
    %1171 = vmatprep.subr.mxu0 0.0
    %1172 = vmatpush1.msra.mxu0 %v1136
    %1173 = vmatprep.subr.mxu0 0.0
    %1174 = vmatpush1.msra.mxu0 %v1137
    %1175 = vmatprep.subr.mxu0 0.0
    %1176 = vmatpush1.msra.mxu0 %v1138
    %1177 = vmatprep.subr.mxu0 0.0
    %1178 = vmatpush1.msra.mxu0 %v1139
    %1179 = vmatprep.subr.mxu0 0.0
    %1180 = vmatpush1.msra.mxu0 0.0
    %1181 = vmatprep.subr.mxu0 0.0
    %1182 = vmatpush1.msra.mxu0 0.0
    %1183 = vmatprep.subr.mxu0 0.0
    %1184 = vmatpush1.msra.mxu0 0.0
    %1185 = vmatprep.subr.mxu0 0.0
    %1186 = vmatpush1.msra.mxu0 0.0
    %1187 = vmatprep.subr.mxu0 0.0
    %1188 = vmatpush1.msra.mxu0 0.0
    %1189 = vmatprep.subr.mxu0 0.0
    %1190 = vmatpush1.msra.mxu0 0.0
    %1191 = vmatprep.subr.mxu0 0.0
    %1192 = vmatpush1.msra.mxu0 0.0
    %1193 = vmatprep.subr.mxu0 0.0
    %1194 = vmatpush1.msra.mxu0 0.0
    %1195 = vmatprep.subr.mxu0 0.0
    %1196 = vmatpush1.msra.mxu0 0.0
    %1197 = vmatprep.subr.mxu0 0.0
    %1198 = vmatpush1.msra.mxu0 0.0
    %1199 = vmatprep.subr.mxu0 0.0
    %1200 = vmatpush1.msra.mxu0 0.0
    %1201 = vmatprep.subr.mxu0 0.0
    %1202 = vmatpush1.msra.mxu0 0.0
    %1203 = vmatprep.subr.mxu0 0.0
    %1204 = vmatpush1.msra.mxu0 0.0
    %1205 = vmatprep.subr.mxu0 0.0
    %1206 = vmatpush1.msra.mxu0 0.0
    %1207 = vmatprep.subr.mxu0 0.0
    %1208 = vmatpush1.msra.mxu0 0.0
    %1209 = vmatprep.subr.mxu0 0.0
    %1210 = vmatpush1.msra.mxu0 0.0
    %1211 = vmatprep.mubr.f32.mxu0 0.0
    %1212 = vmatmul.mubr.f32.gmra.mrb[0].mxu0 %v1123
    %v1213 = vpop.f32.mrb[0].mxu0
    %v1214 = vadd.f32 %v1145, %v1213
    %v1215 = vpop.f32.mrb[0].mxu0
    %1216 = vdwg.mxu0
    %1217 = vst [vmem:[#allocation16] sm:$0xff] %v1214
    // Predicated region
    $region82: #{tpu_custom_call.1} parent=1 // pred_check
      _
    $region83: #{tpu_custom_call.1} parent=1 // pred_check_branch
      %1219 = sbr.rel (0) target = $region85
    $region84: #{tpu_custom_call.1} parent=1 // pred_region
      %s1221 = ssub.s32 128, 128
      %1222 = vsyncadd [#allocation4], %s1221
      %s1224 = sshll.u32 [#allocation16], 4
      %s1225 = int_to_ptr.vmem [resolvable:$true] %s1224
      %1227 = dma.vmem_to_hbm [thread:$0]  %s1225, 128, %s12, [#allocation4]
    $region85: #{tpu_custom_call.1} parent=1 // pred_fallthru
      _
    // Predicated region
    $region86: #{tpu_custom_call.1} parent=1 // pred_check
      _
    $region87: #{tpu_custom_call.1} parent=1 // pred_check_branch
      %1229 = sbr.rel (0) target = $region89
    $region88: #{tpu_custom_call.1} parent=1 // pred_region
      %1230 = dma.done [#allocation4], 128
    $region89: #{tpu_custom_call.1} parent=1 // pred_fallthru
      _
    %1231 = vsyncpa [#allocation3], 1
    %1232 = vsyncpa [#allocation6], 1
    %1233 = vsyncpa [#allocation9], 1
    %1234 = vsyncpa [#allocation12], 1
    %1235 = vsyncpa [#allocation15], 1
    %1236 = vsyncpa [#allocation4], 1

</llo_original>
